<compile_context>
chip_gen: v6e
topology: v6e:2x2x1
jax: 0.10.0
libtpu: 0.0.40
codegen_flags: <defaults>
</compile_context>

<pallas_src>
import math

import jax
import jax.numpy as jnp
from jax import lax
from jax.experimental import pallas as pl
from jax.experimental.pallas import tpu as pltpu

HIDDEN_LAYERS = 4
L = 9                  # len(workloads)
M = 32
N = 4
IN_DIM = N * 9         # 36

NUM_STACKED = HIDDEN_LAYERS + 1   # 4 hidden layers + end layer share one stack
P = 128                # padded lane width for all hidden activations / weights
TB_CAP = 2048          # max rows per batch tile (f32 tiles stay << 16 MiB VMEM)
MIN_STEPS = 2          # >=2 grid steps so v7x's 2 TensorCores both get work


def _round_up(x, m):
    return (x + m - 1) // m * m


def _choose_tiling(batch, *, tb_cap=TB_CAP, min_steps=MIN_STEPS):
    """Pick (tile_rows, padded_batch, grid_steps) for a given batch size."""
    steps = max(min_steps, pl.cdiv(batch, tb_cap))
    tb = _round_up(max(pl.cdiv(batch, steps), 8), 8)
    b_pad = steps * tb
    return tb, b_pad, steps


def mlp_kernel(x_ref, w0_ref, b0_ref, w_ref, b_ref, o_ref):
    # x_ref : (tb, 36)               w0_ref: (36, 128)      b0_ref: (1, 128) f32
    # w_ref : (5, 128, 128)          b_ref : (5, 1, 128) f32
    # o_ref : (tb, 9) f32
    cdt = w_ref.dtype

    # Start layer: contract over the true K=36 (no lane padding of x).
    h = jnp.dot(x_ref[...].astype(cdt), w0_ref[...],
                preferred_element_type=jnp.float32) + b0_ref[...]
    h = jnp.maximum(h, 0.0)

    # 4 hidden layers: identical (tb,128)@(128,128) matmul + bias + ReLU steps
    # on zero-padded weights (padding + ReLU(0)=0 keep the math exact).
    def layer(i, h):
        y = jnp.dot(h.astype(cdt), w_ref[i],
                    preferred_element_type=jnp.float32) + b_ref[i]
        return jnp.maximum(y, 0.0)

    h = lax.fori_loop(0, NUM_STACKED - 1, layer, h, unroll=True)

    # End layer, no activation; store only the L meaningful lanes.
    out = jnp.dot(h.astype(cdt), w_ref[NUM_STACKED - 1],
                  preferred_element_type=jnp.float32) + b_ref[NUM_STACKED - 1]
    o_ref[...] = out[:, :L].astype(o_ref.dtype)


def pack_params(params, dtype=jnp.float32):
    """Pack the 6 (W, b) pairs for the kernel.

    Returns:
      w0   : (IN_DIM, P)          start weight, output cols zero-padded to 128
      b0   : (1, P) float32       start bias, zero-padded
      w_stk: (NUM_STACKED, P, P)  hidden + end weights, zero-padded to 128x128
      b_stk: (NUM_STACKED, 1, P)  float32 biases, zero-padded
    Weights are stored (in_features, out_features) so the kernel computes x @ W + b.
    """
    w0, b0 = params[0]
    w0_p = jnp.zeros((IN_DIM, P), dtype).at[:, :M].set(w0.astype(dtype))
    b0_p = jnp.zeros((1, P), jnp.float32).at[0, :M].set(b0.astype(jnp.float32))

    w_stk = jnp.zeros((NUM_STACKED, P, P), dtype)
    b_stk = jnp.zeros((NUM_STACKED, 1, P), jnp.float32)
    for i, (w, b) in enumerate(params[1:]):
        fan_in, fan_out = w.shape
        w_stk = w_stk.at[i, :fan_in, :fan_out].set(w.astype(dtype))
        b_stk = b_stk.at[i, 0, :fan_out].set(b.astype(jnp.float32))
    return w0_p, b0_p, w_stk, b_stk


def workload_forward(x, w0_p, b0_p, w_stk, b_stk):
    """x: (B, 36). Weights as produced by pack_params. Returns (B, 9) float32."""
    B, in_dim = x.shape
    assert in_dim == IN_DIM

    tb, b_pad, steps = _choose_tiling(B)
    cdt = w_stk.dtype

    x_in = x.astype(cdt)
    if b_pad != B:
        # Only a small row pad up to steps*tb; padded rows are discarded below.
        x_in = jnp.zeros((b_pad, IN_DIM), cdt).at[:B].set(x_in)

    out = pl.pallas_call(
        mlp_kernel,
        out_shape=jax.ShapeDtypeStruct((b_pad, L), jnp.float32),
        grid=(steps,),
        in_specs=[
            pl.BlockSpec((tb, IN_DIM), lambda i: (i, 0)),
            pl.BlockSpec((IN_DIM, P), lambda i: (0, 0)),
            pl.BlockSpec((1, P), lambda i: (0, 0)),
            pl.BlockSpec((NUM_STACKED, P, P), lambda i: (0, 0, 0)),
            pl.BlockSpec((NUM_STACKED, 1, P), lambda i: (0, 0, 0)),
        ],
        out_specs=pl.BlockSpec((tb, L), lambda i: (i, 0)),
        compiler_params=pltpu.CompilerParams(
            dimension_semantics=("parallel",)),
    )(x_in, w0_p, b0_p, w_stk, b_stk)

    return out if b_pad == B else out[:B]


def init_params(key):
    """Deterministic PyTorch-style Linear init: U(-1/sqrt(fan_in), 1/sqrt(fan_in))."""
    dims = [(IN_DIM, M)]
    for i in range(HIDDEN_LAYERS):
        dims.append((M // (2 ** i), M // (2 ** i) // 2))
    dims.append((M // (2 ** HIDDEN_LAYERS), L))

    params = []
    for (fan_in, fan_out) in dims:
        key, kw, kb = jax.random.split(key, 3)
        bound = 1.0 / math.sqrt(fan_in)
        w = jax.random.uniform(kw, (fan_in, fan_out), jnp.float32, -bound, bound)
        b = jax.random.uniform(kb, (fan_out,), jnp.float32, -bound, bound)
        params.append((w, b))
    return params


def reference_forward(x, params):
    h = x
    for i, (w, b) in enumerate(params):
        h = h @ w + b
        if i < len(params) - 1:
            h = jnp.maximum(h, 0.0)
    return h


if __name__ == "__main__":
    key = jax.random.PRNGKey(0)
    key, kx, kx2 = jax.random.split(key, 3)

    params = init_params(key)

    # Primary check: f32 path (exact module semantics), B=256 -> 2 parallel tiles.
    B = 256
    x = jax.random.normal(kx, (B, IN_DIM), jnp.float32)
    packed_f32 = pack_params(params, jnp.float32)
    out = jax.block_until_ready(workload_forward(x, *packed_f32))
    ref = reference_forward(x, params)
    assert out.shape == (B, L), out.shape
    assert jnp.allclose(out, ref, atol=1e-5, rtol=1e-5), "f32 mismatch vs reference"

    # Remainder-tile check: B not a multiple of the tile (exercises row padding).
    B2 = 200
    x2 = jax.random.normal(kx2, (B2, IN_DIM), jnp.float32)
    out2 = jax.block_until_ready(workload_forward(x2, *packed_f32))
    ref2 = reference_forward(x2, params)
    assert out2.shape == (B2, L), out2.shape
    assert jnp.allclose(out2, ref2, atol=1e-5, rtol=1e-5), "f32 (uneven B) mismatch"

    # bf16 MXU path (perf option from the review); relaxed tolerance for bf16
    # input/weight rounding — accumulation stays f32.
    packed_bf16 = pack_params(params, jnp.bfloat16)
    out_bf16 = jax.block_until_ready(workload_forward(x, *packed_bf16))
    assert out_bf16.shape == (B, L), out_bf16.shape
    assert jnp.allclose(out_bf16, ref, atol=1.5e-1, rtol=5e-2), "bf16 mismatch"

    print("KERNEL_OK")
</pallas_src>

<mosaic_0001>
module attributes {stable_mosaic.version = 11 : i64} {
  func.func @mlp_kernel(%arg0: i32, %arg1: memref<128x36xf32, #tpu.memory_space<vmem>>, %arg2: memref<36x128xf32, #tpu.memory_space<vmem>>, %arg3: memref<1x128xf32, #tpu.memory_space<vmem>>, %arg4: memref<5x128x128xf32, #tpu.memory_space<vmem>>, %arg5: memref<5x1x128xf32, #tpu.memory_space<vmem>>, %arg6: memref<128x9xf32, #tpu.memory_space<vmem>>) attributes {dimension_semantics = [#tpu.dimension_semantics<parallel>], iteration_bounds = array<i64: 2>, scalar_prefetch = 0 : i64, scratch_operands = 0 : i64, tpu.core_type = #tpu.core_type<tc>, window_params = [{transform_indices = @transform_0, window_bounds = array<i64: 128, 36>}, {pipeline_mode = #tpu.pipeline_mode<synchronous>, transform_indices = @transform_1, window_bounds = array<i64: 36, 128>}, {pipeline_mode = #tpu.pipeline_mode<synchronous>, transform_indices = @transform_2, window_bounds = array<i64: 1, 128>}, {pipeline_mode = #tpu.pipeline_mode<synchronous>, transform_indices = @transform_3, window_bounds = array<i64: 5, 128, 128>}, {pipeline_mode = #tpu.pipeline_mode<synchronous>, transform_indices = @transform_4, window_bounds = array<i64: 5, 1, 128>}, {transform_indices = @transform_5, window_bounds = array<i64: 128, 9>}]} {
    %c0 = arith.constant 0 : index
    %c0_0 = arith.constant 0 : index
    %0 = vector.load %arg1[%c0, %c0_0] : memref<128x36xf32, #tpu.memory_space<vmem>>, vector<128x36xf32>
    %c0_1 = arith.constant 0 : index
    %c0_2 = arith.constant 0 : index
    %1 = vector.load %arg2[%c0_1, %c0_2] : memref<36x128xf32, #tpu.memory_space<vmem>>, vector<36x128xf32>
    %cst = arith.constant dense<0.000000e+00> : vector<128x128xf32>
    %2 = tpu.matmul %0, %1, %cst {dimension_numbers = #tpu.dot_dimension_numbers<[1], [0], [0], [1], [0, 0, 1, 1], [], []>} : vector<128x36xf32>, vector<36x128xf32>, vector<128x128xf32> -> vector<128x128xf32>
    %c0_3 = arith.constant 0 : index
    %c0_4 = arith.constant 0 : index
    %3 = vector.load %arg3[%c0_3, %c0_4] : memref<1x128xf32, #tpu.memory_space<vmem>>, vector<1x128xf32>
    %4 = vector.broadcast %3 : vector<1x128xf32> to vector<128x128xf32>
    %5 = arith.addf %2, %4 : vector<128x128xf32>
    %cst_5 = arith.constant 0.000000e+00 : f32
    %6 = vector.broadcast %cst_5 : f32 to vector<128x128xf32>
    %7 = arith.maximumf %5, %6 : vector<128x128xf32>
    %c0_i32 = arith.constant 0 : i32
    %8 = arith.index_cast %c0_i32 : i32 to index
    %c0_6 = arith.constant 0 : index
    %c0_7 = arith.constant 0 : index
    %9 = vector.load %arg4[%8, %c0_6, %c0_7] : memref<5x128x128xf32, #tpu.memory_space<vmem>>, vector<1x128x128xf32>
    %10 = vector.shape_cast %9 : vector<1x128x128xf32> to vector<128x128xf32>
    %cst_8 = arith.constant dense<0.000000e+00> : vector<128x128xf32>
    %11 = tpu.matmul %7, %10, %cst_8 {dimension_numbers = #tpu.dot_dimension_numbers<[1], [0], [0], [1], [0, 0, 1, 1], [], []>} : vector<128x128xf32>, vector<128x128xf32>, vector<128x128xf32> -> vector<128x128xf32>
    %12 = arith.index_cast %c0_i32 : i32 to index
    %c0_9 = arith.constant 0 : index
    %c0_10 = arith.constant 0 : index
    %13 = vector.load %arg5[%12, %c0_9, %c0_10] : memref<5x1x128xf32, #tpu.memory_space<vmem>>, vector<1x1x128xf32>
    %14 = vector.shape_cast %13 : vector<1x1x128xf32> to vector<1x128xf32>
    %15 = vector.broadcast %14 : vector<1x128xf32> to vector<128x128xf32>
    %16 = arith.addf %11, %15 : vector<128x128xf32>
    %cst_11 = arith.constant 0.000000e+00 : f32
    %17 = vector.broadcast %cst_11 : f32 to vector<128x128xf32>
    %18 = arith.maximumf %16, %17 : vector<128x128xf32>
    %c1_i32 = arith.constant 1 : i32
    %19 = arith.index_cast %c1_i32 : i32 to index
    %c0_12 = arith.constant 0 : index
    %c0_13 = arith.constant 0 : index
    %20 = vector.load %arg4[%19, %c0_12, %c0_13] : memref<5x128x128xf32, #tpu.memory_space<vmem>>, vector<1x128x128xf32>
    %21 = vector.shape_cast %20 : vector<1x128x128xf32> to vector<128x128xf32>
    %cst_14 = arith.constant dense<0.000000e+00> : vector<128x128xf32>
    %22 = tpu.matmul %18, %21, %cst_14 {dimension_numbers = #tpu.dot_dimension_numbers<[1], [0], [0], [1], [0, 0, 1, 1], [], []>} : vector<128x128xf32>, vector<128x128xf32>, vector<128x128xf32> -> vector<128x128xf32>
    %23 = arith.index_cast %c1_i32 : i32 to index
    %c0_15 = arith.constant 0 : index
    %c0_16 = arith.constant 0 : index
    %24 = vector.load %arg5[%23, %c0_15, %c0_16] : memref<5x1x128xf32, #tpu.memory_space<vmem>>, vector<1x1x128xf32>
    %25 = vector.shape_cast %24 : vector<1x1x128xf32> to vector<1x128xf32>
    %26 = vector.broadcast %25 : vector<1x128xf32> to vector<128x128xf32>
    %27 = arith.addf %22, %26 : vector<128x128xf32>
    %cst_17 = arith.constant 0.000000e+00 : f32
    %28 = vector.broadcast %cst_17 : f32 to vector<128x128xf32>
    %29 = arith.maximumf %27, %28 : vector<128x128xf32>
    %c2_i32 = arith.constant 2 : i32
    %30 = arith.index_cast %c2_i32 : i32 to index
    %c0_18 = arith.constant 0 : index
    %c0_19 = arith.constant 0 : index
    %31 = vector.load %arg4[%30, %c0_18, %c0_19] : memref<5x128x128xf32, #tpu.memory_space<vmem>>, vector<1x128x128xf32>
    %32 = vector.shape_cast %31 : vector<1x128x128xf32> to vector<128x128xf32>
    %cst_20 = arith.constant dense<0.000000e+00> : vector<128x128xf32>
    %33 = tpu.matmul %29, %32, %cst_20 {dimension_numbers = #tpu.dot_dimension_numbers<[1], [0], [0], [1], [0, 0, 1, 1], [], []>} : vector<128x128xf32>, vector<128x128xf32>, vector<128x128xf32> -> vector<128x128xf32>
    %34 = arith.index_cast %c2_i32 : i32 to index
    %c0_21 = arith.constant 0 : index
    %c0_22 = arith.constant 0 : index
    %35 = vector.load %arg5[%34, %c0_21, %c0_22] : memref<5x1x128xf32, #tpu.memory_space<vmem>>, vector<1x1x128xf32>
    %36 = vector.shape_cast %35 : vector<1x1x128xf32> to vector<1x128xf32>
    %37 = vector.broadcast %36 : vector<1x128xf32> to vector<128x128xf32>
    %38 = arith.addf %33, %37 : vector<128x128xf32>
    %cst_23 = arith.constant 0.000000e+00 : f32
    %39 = vector.broadcast %cst_23 : f32 to vector<128x128xf32>
    %40 = arith.maximumf %38, %39 : vector<128x128xf32>
    %c3_i32 = arith.constant 3 : i32
    %41 = arith.index_cast %c3_i32 : i32 to index
    %c0_24 = arith.constant 0 : index
    %c0_25 = arith.constant 0 : index
    %42 = vector.load %arg4[%41, %c0_24, %c0_25] : memref<5x128x128xf32, #tpu.memory_space<vmem>>, vector<1x128x128xf32>
    %43 = vector.shape_cast %42 : vector<1x128x128xf32> to vector<128x128xf32>
    %cst_26 = arith.constant dense<0.000000e+00> : vector<128x128xf32>
    %44 = tpu.matmul %40, %43, %cst_26 {dimension_numbers = #tpu.dot_dimension_numbers<[1], [0], [0], [1], [0, 0, 1, 1], [], []>} : vector<128x128xf32>, vector<128x128xf32>, vector<128x128xf32> -> vector<128x128xf32>
    %45 = arith.index_cast %c3_i32 : i32 to index
    %c0_27 = arith.constant 0 : index
    %c0_28 = arith.constant 0 : index
    %46 = vector.load %arg5[%45, %c0_27, %c0_28] : memref<5x1x128xf32, #tpu.memory_space<vmem>>, vector<1x1x128xf32>
    %47 = vector.shape_cast %46 : vector<1x1x128xf32> to vector<1x128xf32>
    %48 = vector.broadcast %47 : vector<1x128xf32> to vector<128x128xf32>
    %49 = arith.addf %44, %48 : vector<128x128xf32>
    %cst_29 = arith.constant 0.000000e+00 : f32
    %50 = vector.broadcast %cst_29 : f32 to vector<128x128xf32>
    %51 = arith.maximumf %49, %50 : vector<128x128xf32>
    %c4_i32 = arith.constant 4 : i32
    %c4 = arith.constant 4 : index
    %c0_30 = arith.constant 0 : index
    %c0_31 = arith.constant 0 : index
    %52 = vector.load %arg4[%c4, %c0_30, %c0_31] : memref<5x128x128xf32, #tpu.memory_space<vmem>>, vector<1x128x128xf32>
    %53 = vector.shape_cast %52 : vector<1x128x128xf32> to vector<128x128xf32>
    %cst_32 = arith.constant dense<0.000000e+00> : vector<128x128xf32>
    %54 = tpu.matmul %51, %53, %cst_32 {dimension_numbers = #tpu.dot_dimension_numbers<[1], [0], [0], [1], [0, 0, 1, 1], [], []>} : vector<128x128xf32>, vector<128x128xf32>, vector<128x128xf32> -> vector<128x128xf32>
    %c4_33 = arith.constant 4 : index
    %c0_34 = arith.constant 0 : index
    %c0_35 = arith.constant 0 : index
    %55 = vector.load %arg5[%c4_33, %c0_34, %c0_35] : memref<5x1x128xf32, #tpu.memory_space<vmem>>, vector<1x1x128xf32>
    %56 = vector.shape_cast %55 : vector<1x1x128xf32> to vector<1x128xf32>
    %57 = vector.broadcast %56 : vector<1x128xf32> to vector<128x128xf32>
    %58 = arith.addf %54, %57 : vector<128x128xf32>
    %59 = vector.extract_strided_slice %58 {offsets = [0, 0], sizes = [128, 9], strides = [1, 1]} : vector<128x128xf32> to vector<128x9xf32>
    %c0_36 = arith.constant 0 : index
    %c0_37 = arith.constant 0 : index
    %60 = vector.load %arg6[%c0_36, %c0_37] : memref<128x9xf32, #tpu.memory_space<vmem>>, vector<128x9xf32>
    tpu.vector_store %arg6[%c0_36, %c0_37], %59 {strides = array<i32>} : memref<128x9xf32, #tpu.memory_space<vmem>>, vector<128x9xf32>,
    return
  }
  func.func @transform_0(%arg0: i32) -> (i32, i32) {
    %c0_i32 = arith.constant 0 : i32
    %c0_i32_0 = arith.constant 0 : i32
    return %arg0, %c0_i32 : i32, i32
  }
  func.func @transform_1(%arg0: i32) -> (i32, i32) {
    %c0_i32 = arith.constant 0 : i32
    %c0_i32_0 = arith.constant 0 : i32
    %c0_i32_1 = arith.constant 0 : i32
    return %c0_i32, %c0_i32_0 : i32, i32
  }
  func.func @transform_2(%arg0: i32) -> (i32, i32) {
    %c0_i32 = arith.constant 0 : i32
    %c0_i32_0 = arith.constant 0 : i32
    %c0_i32_1 = arith.constant 0 : i32
    return %c0_i32, %c0_i32_0 : i32, i32
  }
  func.func @transform_3(%arg0: i32) -> (i32, i32, i32) {
    %c0_i32 = arith.constant 0 : i32
    %c0_i32_0 = arith.constant 0 : i32
    %c0_i32_1 = arith.constant 0 : i32
    %c0_i32_2 = arith.constant 0 : i32
    return %c0_i32, %c0_i32_0, %c0_i32_1 : i32, i32, i32
  }
  func.func @transform_4(%arg0: i32) -> (i32, i32, i32) {
    %c0_i32 = arith.constant 0 : i32
    %c0_i32_0 = arith.constant 0 : i32
    %c0_i32_1 = arith.constant 0 : i32
    %c0_i32_2 = arith.constant 0 : i32
    return %c0_i32, %c0_i32_0, %c0_i32_1 : i32, i32, i32
  }
  func.func @transform_5(%arg0: i32) -> (i32, i32) {
    %c0_i32 = arith.constant 0 : i32
    %c0_i32_0 = arith.constant 0 : i32
    return %arg0, %c0_i32 : i32, i32
  }
}

</mosaic_0001>

<llo_original>
// kernel: tpu_custom_call.1
$region0: #{tpu_custom_call.1}
  #allocation0 [shape = 'u32[]', space=smem, size = 0x4, offset = 0x4, fixed_abs, tag = 'smem constant byte address 0x4 - core index']
  #allocation1 [shape = 'u32[144,128]{1,0:T(1,128)}', space=vmem, size = 0x12000, scoped, tag = 'internal scratch']
  %s0 = inlined_call_operand.vmem [shape: f32[256,36], index: 0, kind: input, shape index: {}]
  %s1 = inlined_call_operand.vmem [shape: f32[36,128], index: 1, kind: input, shape index: {}]
  %s2 = inlined_call_operand.vmem [shape: f32[1,128], index: 2, kind: input, shape index: {}]
  %s3 = inlined_call_operand.hbm [shape: f32[5,128,128], index: 3, kind: input, shape index: {}]
  %s4 = inlined_call_operand.vmem [shape: f32[5,1,128], index: 4, kind: input, shape index: {}]
  %s5 = inlined_call_operand.vmem [shape: f32[256,9], index: 5, kind: output, shape index: {}]
  %s6 = sld [smem:[#allocation0]]
  $region57: #{tpu_custom_call.1} parent=0
    _
  %s8 = ssub.s32 1, %s6
  %s9 = scalar_select 0, %s8, %s6
  $region1: #{tpu_custom_call.1} parent=0
    #allocation2 [shape = 'u8[327680]{0}', space=vmem, size = 0x50000, scoped, tag = 'input window, operand 3, single buffered']
    #allocation3 [shape = 's32[2]{0}', space=sflag, size = 0x8, scoped, tag = 'scoped memory for tpu_custom_call.1']
    %10 = vsyncpa [#allocation3], 0
    loop: start=0, step=1, limit=4
    $region2: #{tpu_custom_call.1} parent=1 // loop_pre_header
      _
    $region3: #{tpu_custom_call.1} parent=1 // loop_header
      %s12 = sphi 0, %s16
      %p13 = scmp.ge.s32.totalorder %s12, 4
      %s22 = sphi 0, %s24
      %s25 = sphi 0, %s22
      %s26 = sphi 0, %s25
      %s42 = sphi 0, %s26
      %s46 = sphi 0, %s46
      %s48 = sphi 0, %s46
      %s49 = sphi 0, %s48
      %s63 = sphi 0, %s49
      %s67 = sphi 0, %s67
      %s69 = sphi 0, %s67
      %s70 = sphi 0, %s69
      %s84 = sphi 0, %s70
      %s88 = sphi 0, %s88
      %s90 = sphi 0, %s88
      %s91 = sphi 0, %s90
      %s105 = sphi 0, %s91
      %s109 = sphi 0, %s109
      %s111 = sphi 0, %s109
      %s112 = sphi 0, %s111
      %s126 = sphi 0, %s112
      %s132 = sphi 0, %s134
      %s135 = sphi 0, %s132
      %s136 = sphi 0, %s135
      %s152 = sphi 0, %s136
    $region4: #{tpu_custom_call.1} parent=1 // loop_header_branch
      %15 = sbr.rel (%p13) target = $region8
    $region5: #{tpu_custom_call.1} parent=1 // loop_body
      %s17 = ssub.s32 %s12, 1
      %s18 = ssub.s32 %s12, 2
      %s19 = sadd.s32 %s12, 1
      %s20 = ssub.s32 %s12, %s19
      %p21 = scmp.eq.s32.totalorder %s20, 0
      %s23 = sadd.s32 %s22, 1
      %s24 = scalar_select %p21, %s22, %s23
      %p27 = pneg %p21
      %p28 = scmp.eq.s32.totalorder %s12, 1
      %p29 = por %p27, %p28
      %p30 = scmp.ne.s32.totalorder %s22, %s25
      %p31 = scmp.eq.s32.totalorder %s12, 0
      %p32 = por %p30, %p31
      %p33 = scmp.ne.s32.totalorder %s22, %s25
      %p34 = scmp.eq.s32.totalorder %s17, 1
      %p35 = por %p33, %p34
      %p36 = scmp.ne.s32.totalorder %s25, %s26
      %p37 = scmp.eq.s32.totalorder %s17, 0
      %p38 = por %p36, %p37
      %p39 = scmp.ne.s32.totalorder %s25, %s26
      %p40 = scmp.eq.s32.totalorder %s18, 1
      %p41 = por %p39, %p40
      %p43 = scmp.ne.s32.totalorder %s26, %s42
      %p44 = scmp.eq.s32.totalorder %s18, 0
      %p45 = por %p43, %p44
      %s47 = sadd.s32 %s46, 1
      %p50 = scmp.eq.s32.totalorder %s12, 1
      %p51 = scmp.ne.s32.totalorder %s46, %s48
      %p52 = scmp.eq.s32.totalorder %s12, 0
      %p53 = por %p51, %p52
      %p54 = scmp.ne.s32.totalorder %s46, %s48
      %p55 = scmp.eq.s32.totalorder %s17, 1
      %p56 = por %p54, %p55
      %p57 = scmp.ne.s32.totalorder %s48, %s49
      %p58 = scmp.eq.s32.totalorder %s17, 0
      %p59 = por %p57, %p58
      %p60 = scmp.ne.s32.totalorder %s48, %s49
      %p61 = scmp.eq.s32.totalorder %s18, 1
      %p62 = por %p60, %p61
      %p64 = scmp.ne.s32.totalorder %s49, %s63
      %p65 = scmp.eq.s32.totalorder %s18, 0
      %p66 = por %p64, %p65
      %s68 = sadd.s32 %s67, 1
      %p71 = scmp.eq.s32.totalorder %s12, 1
      %p72 = scmp.ne.s32.totalorder %s67, %s69
      %p73 = scmp.eq.s32.totalorder %s12, 0
      %p74 = por %p72, %p73
      %p75 = scmp.ne.s32.totalorder %s67, %s69
      %p76 = scmp.eq.s32.totalorder %s17, 1
      %p77 = por %p75, %p76
      %p78 = scmp.ne.s32.totalorder %s69, %s70
      %p79 = scmp.eq.s32.totalorder %s17, 0
      %p80 = por %p78, %p79
      %p81 = scmp.ne.s32.totalorder %s69, %s70
      %p82 = scmp.eq.s32.totalorder %s18, 1
      %p83 = por %p81, %p82
      %p85 = scmp.ne.s32.totalorder %s70, %s84
      %p86 = scmp.eq.s32.totalorder %s18, 0
      %p87 = por %p85, %p86
      %s89 = sadd.s32 %s88, 1
      %p92 = scmp.eq.s32.totalorder %s12, 1
      %p93 = scmp.ne.s32.totalorder %s88, %s90
      %p94 = scmp.eq.s32.totalorder %s12, 0
      %p95 = por %p93, %p94
      %p96 = scmp.ne.s32.totalorder %s88, %s90
      %p97 = scmp.eq.s32.totalorder %s17, 1
      %p98 = por %p96, %p97
      %p99 = scmp.ne.s32.totalorder %s90, %s91
      %p100 = scmp.eq.s32.totalorder %s17, 0
      %p101 = por %p99, %p100
      %p102 = scmp.ne.s32.totalorder %s90, %s91
      %p103 = scmp.eq.s32.totalorder %s18, 1
      %p104 = por %p102, %p103
      %p106 = scmp.ne.s32.totalorder %s91, %s105
      %p107 = scmp.eq.s32.totalorder %s18, 0
      %p108 = por %p106, %p107
      %s110 = sadd.s32 %s109, 1
      %p113 = scmp.eq.s32.totalorder %s12, 1
      %p114 = scmp.ne.s32.totalorder %s109, %s111
      %p115 = scmp.eq.s32.totalorder %s12, 0
      %p116 = por %p114, %p115
      %p117 = scmp.ne.s32.totalorder %s109, %s111
      %p118 = scmp.eq.s32.totalorder %s17, 1
      %p119 = por %p117, %p118
      %p120 = scmp.ne.s32.totalorder %s111, %s112
      %p121 = scmp.eq.s32.totalorder %s17, 0
      %p122 = por %p120, %p121
      %p123 = scmp.ne.s32.totalorder %s111, %s112
      %p124 = scmp.eq.s32.totalorder %s18, 1
      %p125 = por %p123, %p124
      %p127 = scmp.ne.s32.totalorder %s112, %s126
      %p128 = scmp.eq.s32.totalorder %s18, 0
      %p129 = por %p127, %p128
      %s130 = ssub.s32 %s12, %s19
      %p131 = scmp.eq.s32.totalorder %s130, 0
      %s133 = sadd.s32 %s132, 1
      %s134 = scalar_select %p131, %s132, %s133
      %p137 = pneg %p131
      %p138 = scmp.eq.s32.totalorder %s12, 1
      %p139 = por %p137, %p138
      %p140 = scmp.ne.s32.totalorder %s132, %s135
      %p141 = scmp.eq.s32.totalorder %s12, 0
      %p142 = por %p140, %p141
      %p143 = scmp.ne.s32.totalorder %s132, %s135
      %p144 = scmp.eq.s32.totalorder %s17, 1
      %p145 = por %p143, %p144
      %p146 = scmp.ne.s32.totalorder %s135, %s136
      %p147 = scmp.eq.s32.totalorder %s17, 0
      %p148 = por %p146, %p147
      %p149 = scmp.ne.s32.totalorder %s135, %s136
      %p150 = scmp.eq.s32.totalorder %s18, 1
      %p151 = por %p149, %p150
      %p153 = scmp.ne.s32.totalorder %s136, %s152
      %p154 = scmp.eq.s32.totalorder %s18, 0
      %p155 = por %p153, %p154
      %p156 = scmp.le.s32.totalorder 1, %s12
      %p157 = scmp.lt.s32.totalorder %s12, 3
      %p158 = pnand %p156, %p157
      %p159 = pneg %p158
      // Predicated region
      $region9: #{tpu_custom_call.1} parent=5 // pred_check
        _
      $region10: #{tpu_custom_call.1} parent=5 // pred_check_branch
        %161 = sbr.rel (%p158) target = $region12
      $region11: #{tpu_custom_call.1} parent=5 // pred_region
        %s162 = ssub.s32 %s12, 1
        // Predicated region
        $region13: #{tpu_custom_call.1} parent=11 // pred_check
          %p163 = pneg %p59
        $region14: #{tpu_custom_call.1} parent=11 // pred_check_branch
          %165 = sbr.rel (%p163) target = $region16
        $region15: #{tpu_custom_call.1} parent=11 // pred_region
          _
        $region16: #{tpu_custom_call.1} parent=11 // pred_fallthru
          _
        // Predicated region
        $region17: #{tpu_custom_call.1} parent=11 // pred_check
          %p166 = pneg %p80
        $region18: #{tpu_custom_call.1} parent=11 // pred_check_branch
          %168 = sbr.rel (%p166) target = $region20
        $region19: #{tpu_custom_call.1} parent=11 // pred_region
          _
        $region20: #{tpu_custom_call.1} parent=11 // pred_fallthru
          _
        // Predicated region
        $region21: #{tpu_custom_call.1} parent=11 // pred_check
          %p169 = pneg %p101
        $region22: #{tpu_custom_call.1} parent=11 // pred_check_branch
          %171 = sbr.rel (%p169) target = $region24
        $region23: #{tpu_custom_call.1} parent=11 // pred_region
          %s173 = ssub.s32 10240, 10240
          %174 = vsyncadd [#allocation3], %s173
          %s175 = sshll.u32 [#allocation2], 4
          %s176 = int_to_ptr.vmem [resolvable:$true] %s175
          %181 = dma.hbm_to_vmem [thread:$0]  %s3, 10240, %s176, [#allocation3], 128, 128, 8
        $region24: #{tpu_custom_call.1} parent=11 // pred_fallthru
          _
        // Predicated region
        $region25: #{tpu_custom_call.1} parent=11 // pred_check
          %p182 = pneg %p122
        $region26: #{tpu_custom_call.1} parent=11 // pred_check_branch
          %184 = sbr.rel (%p182) target = $region28
        $region27: #{tpu_custom_call.1} parent=11 // pred_region
          _
        $region28: #{tpu_custom_call.1} parent=11 // pred_fallthru
          _
      $region12: #{tpu_custom_call.1} parent=5 // pred_fallthru
        _
      %p185 = scmp.lt.s32.totalorder %s12, 2
      // Predicated region
      $region29: #{tpu_custom_call.1} parent=5 // pred_check
        %p186 = pneg %p185
      $region30: #{tpu_custom_call.1} parent=5 // pred_check_branch
        %188 = sbr.rel (%p186) target = $region32
      $region31: #{tpu_custom_call.1} parent=5 // pred_region
        // Predicated region
        $region33: #{tpu_custom_call.1} parent=31 // pred_check
          %p189 = pneg %p32
        $region34: #{tpu_custom_call.1} parent=31 // pred_check_branch
          %191 = sbr.rel (%p189) target = $region36
        $region35: #{tpu_custom_call.1} parent=31 // pred_region
          %s192 = smul.u32 16, %s12
          %p193 = scmp.lt.s32.totalorder %s192, 31
          %s194 = scalar_select %p193, %s192, 31
          %s195 = smul.addr %s194, 8
          %s196 = scalar_lea.vmem %s0, %s195
          %s197 = smul.u32 16, %s12
        $region36: #{tpu_custom_call.1} parent=31 // pred_fallthru
          _
      $region32: #{tpu_custom_call.1} parent=5 // pred_fallthru
        _
      %p198 = scmp.le.s32.totalorder 1, %s12
      %p199 = scmp.lt.s32.totalorder %s12, 3
      %p200 = pnand %p198, %p199
      %p201 = pneg %p200
      // Predicated region
      $region37: #{tpu_custom_call.1} parent=5 // pred_check
        _
      $region38: #{tpu_custom_call.1} parent=5 // pred_check_branch
        %203 = sbr.rel (%p200) target = $region40
      $region39: #{tpu_custom_call.1} parent=5 // pred_region
        %s204 = ssub.s32 %s12, 1
        // Predicated region
        $region41: #{tpu_custom_call.1} parent=39 // pred_check
          %p205 = pneg %p101
        $region42: #{tpu_custom_call.1} parent=39 // pred_check_branch
          %207 = sbr.rel (%p205) target = $region44
        $region43: #{tpu_custom_call.1} parent=39 // pred_region
          %208 = dma.done [#allocation3], 10240
        $region44: #{tpu_custom_call.1} parent=39 // pred_fallthru
          _
        %s209 = smul.u32 16, %s17
        %p210 = scmp.lt.s32.totalorder %s209, 31
        %s211 = scalar_select %p210, %s209, 31
        %s212 = smul.addr %s211, 8
        %s213 = scalar_lea.vmem %s0, %s212
        %p214 = pneg %p38
        %p215 = pneg %p35
        %p216 = pneg %p59
        %p217 = pneg %p56
        %p218 = pneg %p80
        %p219 = pneg %p77
        %p220 = pneg %p101
        %p221 = pneg %p98
        %p222 = pneg %p122
        %p223 = pneg %p119
        %p224 = pneg %p148
        %p225 = pneg %p145
        %s226 = smul.u32 16, %s17
        %p227 = scmp.lt.s32.totalorder %s226, 31
        %s228 = scalar_select %p227, %s226, 31
        %s229 = smul.addr %s228, 8
        %s230 = scalar_lea.vmem %s5, %s229
        %s231 = smul.u32 16, %s17
        %p232 = scmp.lt.s32.totalorder %s231, 31
        %s233 = scalar_select %p232, %s231, 31
        %s234 = smul.addr %s233, 8
        %s235 = scalar_lea.vmem %s0, %s234
        %s236 = smul.u32 16, %s17
        %s237 = smul.u32 16, %s17
        %p238 = scmp.lt.s32.totalorder %s237, 31
        %s239 = scalar_select %p238, %s237, 31
        %s240 = smul.addr %s239, 8
        %s241 = scalar_lea.vmem %s5, %s240
        %s242 = smul.u32 16, %s17
        %v243 = vld [vmem:[%s235] sm:$0xff]
        %v244 = vld [vmem:[%s235 + $0x8] sm:$0xff]
        %v245 = vld [vmem:[%s235 + $0x10] sm:$0xff]
        %v246 = vld [vmem:[%s235 + $0x18] sm:$0xff]
        %v247 = vld [vmem:[%s235 + $0x20] sm:$0xff]
        %v248 = vld [vmem:[%s235 + $0x28] sm:$0xff]
        %v249 = vld [vmem:[%s235 + $0x30] sm:$0xff]
        %v250 = vld [vmem:[%s235 + $0x38] sm:$0xff]
        %v251 = vld [vmem:[%s235 + $0x40] sm:$0xff]
        %v252 = vld [vmem:[%s235 + $0x48] sm:$0xff]
        %v253 = vld [vmem:[%s235 + $0x50] sm:$0xff]
        %v254 = vld [vmem:[%s235 + $0x58] sm:$0xff]
        %v255 = vld [vmem:[%s235 + $0x60] sm:$0xff]
        %v256 = vld [vmem:[%s235 + $0x68] sm:$0xff]
        %v257 = vld [vmem:[%s235 + $0x70] sm:$0xff]
        %v258 = vld [vmem:[%s235 + $0x78] sm:$0xff]
        %v259 = vld [vmem:[%s1] sm:$0xff]
        %v260 = vld [vmem:[%s1 + $0x8] sm:$0xff]
        %v261 = vld [vmem:[%s1 + $0x10] sm:$0xff]
        %v262 = vld [vmem:[%s1 + $0x18] sm:$0xff]
        %v263 = vld [vmem:[%s1 + $0x20] sm:$0xf]
        %v264 = vld [vmem:[%s2] sm:$0x1]
        %v266 = vlaneseq
        %v267 = vshrl.u32 %v266, 7
        %v268 = vsub.s32 0, %v267
        %v269 = vrot.slane %v264, %v268
        %vm271 = vcmask 293888
        %v273 = vsel %vm271, %v243, 0
        %v276 = vsel %vm271, %v244, 0
        %v279 = vsel %vm271, %v245, 0
        %v282 = vsel %vm271, %v246, 0
        %v285 = vsel %vm271, %v247, 0
        %v288 = vsel %vm271, %v248, 0
        %v291 = vsel %vm271, %v249, 0
        %v294 = vsel %vm271, %v250, 0
        %v297 = vsel %vm271, %v251, 0
        %v300 = vsel %vm271, %v252, 0
        %v303 = vsel %vm271, %v253, 0
        %v306 = vsel %vm271, %v254, 0
        %v309 = vsel %vm271, %v255, 0
        %v312 = vsel %vm271, %v256, 0
        %v315 = vsel %vm271, %v257, 0
        %v318 = vsel %vm271, %v258, 0
        %vm320 = vcmask 1043456
        %v322 = vsel %vm320, %v263, 0
        %324 = vmatprep.subr.mxu0 0.0
        %325 = vmatpush1.msra.mxu0 0.0
        %326 = vmatprep.subr.mxu0 0.0
        %327 = vmatpush1.msra.mxu0 0.0
        %328 = vmatprep.subr.mxu0 0.0
        %329 = vmatpush1.msra.mxu0 0.0
        %330 = vmatprep.subr.mxu0 0.0
        %331 = vmatpush1.msra.mxu0 0.0
        %332 = vmatprep.subr.mxu0 0.0
        %333 = vmatpush1.msra.mxu0 0.0
        %334 = vmatprep.subr.mxu0 0.0
        %335 = vmatpush1.msra.mxu0 0.0
        %336 = vmatprep.subr.mxu0 0.0
        %337 = vmatpush1.msra.mxu0 0.0
        %338 = vmatprep.subr.mxu0 0.0
        %339 = vmatpush1.msra.mxu0 0.0
        %340 = vmatprep.subr.mxu0 0.0
        %341 = vmatpush1.msra.mxu0 0.0
        %342 = vmatprep.subr.mxu0 0.0
        %343 = vmatpush1.msra.mxu0 0.0
        %344 = vmatprep.subr.mxu0 0.0
        %345 = vmatpush1.msra.mxu0 0.0
        %346 = vmatprep.subr.mxu0 0.0
        %347 = vmatpush1.msra.mxu0 %v322
        %348 = vmatprep.subr.mxu0 0.0
        %349 = vmatpush1.msra.mxu0 %v262
        %350 = vmatprep.subr.mxu0 0.0
        %351 = vmatpush1.msra.mxu0 %v261
        %352 = vmatprep.subr.mxu0 0.0
        %353 = vmatpush1.msra.mxu0 %v260
        %354 = vmatprep.subr.mxu0 0.0
        %355 = vmatpush1.msra.mxu0 %v259
        %356 = vmatprep.subr.mxu0 0.0
        %357 = vmatpush2.msra.mxu0 0.0
        %358 = vmatprep.subr.mxu0 0.0
        %359 = vmatpush2.msra.mxu0 0.0
        %360 = vmatprep.subr.mxu0 0.0
        %361 = vmatpush2.msra.mxu0 0.0
        %362 = vmatprep.subr.mxu0 0.0
        %363 = vmatpush2.msra.mxu0 0.0
        %364 = vmatprep.subr.mxu0 0.0
        %365 = vmatpush2.msra.mxu0 0.0
        %366 = vmatprep.subr.mxu0 0.0
        %367 = vmatpush2.msra.mxu0 0.0
        %368 = vmatprep.subr.mxu0 0.0
        %369 = vmatpush2.msra.mxu0 0.0
        %370 = vmatprep.subr.mxu0 0.0
        %371 = vmatpush2.msra.mxu0 0.0
        %372 = vmatprep.subr.mxu0 0.0
        %373 = vmatpush2.msra.mxu0 0.0
        %374 = vmatprep.subr.mxu0 0.0
        %375 = vmatpush2.msra.mxu0 0.0
        %376 = vmatprep.subr.mxu0 0.0
        %377 = vmatpush2.msra.mxu0 0.0
        %378 = vmatprep.subr.mxu0 0.0
        %379 = vmatpush2.msra.mxu0 0.0
        %380 = vmatprep.subr.mxu0 0.0
        %381 = vmatpush2.msra.mxu0 0.0
        %382 = vmatprep.subr.mxu0 0.0
        %383 = vmatpush2.msra.mxu0 0.0
        %384 = vmatprep.subr.mxu0 0.0
        %385 = vmatpush2.msra.mxu0 0.0
        %386 = vmatprep.subr.mxu0 0.0
        %387 = vmatpush2.msra.mxu0 0.0
        %388 = vmatprep.mubr.f32.mxu0 0.0
        %389 = vmatmul.mubr.f32.gmra.mxu0 %v273
        %v390 = vpop.f32.mrf.mxu0
        %v391 = vadd.f32 %v269, %v390
        %v392 = vpop.f32.mrf.mxu0
        %393 = vmatprep.mubr.f32.mxu0 0.0
        %394 = vmatmul.mubr.f32.gmra.mxu0 %v276
        %v395 = vpop.f32.mrf.mxu0
        %v396 = vadd.f32 %v269, %v395
        %v397 = vpop.f32.mrf.mxu0
        %398 = vmatprep.mubr.f32.mxu0 0.0
        %399 = vmatmul.mubr.f32.gmra.mxu0 %v279
        %v400 = vpop.f32.mrf.mxu0
        %v401 = vadd.f32 %v269, %v400
        %v402 = vpop.f32.mrf.mxu0
        %403 = vmatprep.mubr.f32.mxu0 0.0
        %404 = vmatmul.mubr.f32.gmra.mxu0 %v282
        %v405 = vpop.f32.mrf.mxu0
        %v406 = vadd.f32 %v269, %v405
        %v407 = vpop.f32.mrf.mxu0
        %408 = vmatprep.mubr.f32.mxu0 0.0
        %409 = vmatmul.mubr.f32.gmra.mxu0 %v285
        %v410 = vpop.f32.mrf.mxu0
        %v411 = vadd.f32 %v269, %v410
        %v412 = vpop.f32.mrf.mxu0
        %413 = vmatprep.mubr.f32.mxu0 0.0
        %414 = vmatmul.mubr.f32.gmra.mxu0 %v288
        %v415 = vpop.f32.mrf.mxu0
        %v416 = vadd.f32 %v269, %v415
        %v417 = vpop.f32.mrf.mxu0
        %418 = vmatprep.mubr.f32.mxu0 0.0
        %419 = vmatmul.mubr.f32.gmra.mxu0 %v291
        %v420 = vpop.f32.mrf.mxu0
        %v421 = vadd.f32 %v269, %v420
        %v422 = vpop.f32.mrf.mxu0
        %423 = vmatprep.mubr.f32.mxu0 0.0
        %424 = vmatmul.mubr.f32.gmra.mxu0 %v294
        %v425 = vpop.f32.mrf.mxu0
        %v426 = vadd.f32 %v269, %v425
        %v427 = vpop.f32.mrf.mxu0
        %428 = vmatprep.mubr.f32.mxu0 0.0
        %429 = vmatmul.mubr.f32.gmra.mxu0 %v297
        %v430 = vpop.f32.mrf.mxu0
        %v431 = vadd.f32 %v269, %v430
        %v432 = vpop.f32.mrf.mxu0
        %433 = vmatprep.mubr.f32.mxu0 0.0
        %434 = vmatmul.mubr.f32.gmra.mxu0 %v300
        %v435 = vpop.f32.mrf.mxu0
        %v436 = vadd.f32 %v269, %v435
        %v437 = vpop.f32.mrf.mxu0
        %438 = vmatprep.mubr.f32.mxu0 0.0
        %439 = vmatmul.mubr.f32.gmra.mxu0 %v303
        %v440 = vpop.f32.mrf.mxu0
        %v441 = vadd.f32 %v269, %v440
        %v442 = vpop.f32.mrf.mxu0
        %443 = vmatprep.mubr.f32.mxu0 0.0
        %444 = vmatmul.mubr.f32.gmra.mxu0 %v306
        %v445 = vpop.f32.mrf.mxu0
        %v446 = vadd.f32 %v269, %v445
        %v447 = vpop.f32.mrf.mxu0
        %448 = vmatprep.mubr.f32.mxu0 0.0
        %449 = vmatmul.mubr.f32.gmra.mxu0 %v309
        %v450 = vpop.f32.mrf.mxu0
        %v451 = vadd.f32 %v269, %v450
        %v452 = vpop.f32.mrf.mxu0
        %453 = vmatprep.mubr.f32.mxu0 0.0
        %454 = vmatmul.mubr.f32.gmra.mxu0 %v312
        %v455 = vpop.f32.mrf.mxu0
        %v456 = vadd.f32 %v269, %v455
        %v457 = vpop.f32.mrf.mxu0
        %458 = vmatprep.mubr.f32.mxu0 0.0
        %459 = vmatmul.mubr.f32.gmra.mxu0 %v315
        %v460 = vpop.f32.mrf.mxu0
        %v461 = vadd.f32 %v269, %v460
        %v462 = vpop.f32.mrf.mxu0
        %463 = vmatprep.mubr.f32.mxu0 0.0
        %464 = vmatmul.mubr.f32.gmra.mxu0 %v318
        %v465 = vpop.f32.mrf.mxu0
        %v466 = vadd.f32 %v269, %v465
        %v467 = vpop.f32.mrf.mxu0
        %468 = vdwg.mxu0
        %v469 = vmax.f32 %v391, 0.0
        %v470 = vmax.f32 %v396, 0.0
        %v471 = vmax.f32 %v401, 0.0
        %v472 = vmax.f32 %v406, 0.0
        %v473 = vmax.f32 %v411, 0.0
        %v474 = vmax.f32 %v416, 0.0
        %v475 = vmax.f32 %v421, 0.0
        %v476 = vmax.f32 %v426, 0.0
        %v477 = vmax.f32 %v431, 0.0
        %v478 = vmax.f32 %v436, 0.0
        %v479 = vmax.f32 %v441, 0.0
        %v480 = vmax.f32 %v446, 0.0
        %v481 = vmax.f32 %v451, 0.0
        %v482 = vmax.f32 %v456, 0.0
        %v483 = vmax.f32 %v461, 0.0
        %v484 = vmax.f32 %v466, 0.0
        %v485 = vld [vmem:[#allocation2] sm:$0xff]
        %v486 = vld [vmem:[#allocation2 + $0x8] sm:$0xff]
        %v487 = vld [vmem:[#allocation2 + $0x10] sm:$0xff]
        %v488 = vld [vmem:[#allocation2 + $0x18] sm:$0xff]
        %v489 = vld [vmem:[#allocation2 + $0x20] sm:$0xff]
        %v490 = vld [vmem:[#allocation2 + $0x28] sm:$0xff]
        %v491 = vld [vmem:[#allocation2 + $0x30] sm:$0xff]
        %v492 = vld [vmem:[#allocation2 + $0x38] sm:$0xff]
        %v493 = vld [vmem:[#allocation2 + $0x40] sm:$0xff]
        %v494 = vld [vmem:[#allocation2 + $0x48] sm:$0xff]
        %v495 = vld [vmem:[#allocation2 + $0x50] sm:$0xff]
        %v496 = vld [vmem:[#allocation2 + $0x58] sm:$0xff]
        %v497 = vld [vmem:[#allocation2 + $0x60] sm:$0xff]
        %v498 = vld [vmem:[#allocation2 + $0x68] sm:$0xff]
        %v499 = vld [vmem:[#allocation2 + $0x70] sm:$0xff]
        %v500 = vld [vmem:[#allocation2 + $0x78] sm:$0xff]
        %v501 = vld [vmem:[%s4] sm:$0x1]
        %v503 = vlaneseq
        %v504 = vshrl.u32 %v503, 7
        %v505 = vsub.s32 0, %v504
        %v506 = vrot.slane %v501, %v505
        %508 = vmatprep.subr.mxu0 0.0
        %509 = vmatpush1.msra.mxu0 %v500
        %510 = vmatprep.subr.mxu0 0.0
        %511 = vmatpush1.msra.mxu0 %v499
        %512 = vmatprep.subr.mxu0 0.0
        %513 = vmatpush1.msra.mxu0 %v498
        %514 = vmatprep.subr.mxu0 0.0
        %515 = vmatpush1.msra.mxu0 %v497
        %516 = vmatprep.subr.mxu0 0.0
        %517 = vmatpush1.msra.mxu0 %v496
        %518 = vmatprep.subr.mxu0 0.0
        %519 = vmatpush1.msra.mxu0 %v495
        %520 = vmatprep.subr.mxu0 0.0
        %521 = vmatpush1.msra.mxu0 %v494
        %522 = vmatprep.subr.mxu0 0.0
        %523 = vmatpush1.msra.mxu0 %v493
        %524 = vmatprep.subr.mxu0 0.0
        %525 = vmatpush1.msra.mxu0 %v492
        %526 = vmatprep.subr.mxu0 0.0
        %527 = vmatpush1.msra.mxu0 %v491
        %528 = vmatprep.subr.mxu0 0.0
        %529 = vmatpush1.msra.mxu0 %v490
        %530 = vmatprep.subr.mxu0 0.0
        %531 = vmatpush1.msra.mxu0 %v489
        %532 = vmatprep.subr.mxu0 0.0
        %533 = vmatpush1.msra.mxu0 %v488
        %534 = vmatprep.subr.mxu0 0.0
        %535 = vmatpush1.msra.mxu0 %v487
        %536 = vmatprep.subr.mxu0 0.0
        %537 = vmatpush1.msra.mxu0 %v486
        %538 = vmatprep.subr.mxu0 0.0
        %539 = vmatpush1.msra.mxu0 %v485
        %540 = vmatprep.subr.mxu0 0.0
        %541 = vmatpush2.msra.mxu0 0.0
        %542 = vmatprep.subr.mxu0 0.0
        %543 = vmatpush2.msra.mxu0 0.0
        %544 = vmatprep.subr.mxu0 0.0
        %545 = vmatpush2.msra.mxu0 0.0
        %546 = vmatprep.subr.mxu0 0.0
        %547 = vmatpush2.msra.mxu0 0.0
        %548 = vmatprep.subr.mxu0 0.0
        %549 = vmatpush2.msra.mxu0 0.0
        %550 = vmatprep.subr.mxu0 0.0
        %551 = vmatpush2.msra.mxu0 0.0
        %552 = vmatprep.subr.mxu0 0.0
        %553 = vmatpush2.msra.mxu0 0.0
        %554 = vmatprep.subr.mxu0 0.0
        %555 = vmatpush2.msra.mxu0 0.0
        %556 = vmatprep.subr.mxu0 0.0
        %557 = vmatpush2.msra.mxu0 0.0
        %558 = vmatprep.subr.mxu0 0.0
        %559 = vmatpush2.msra.mxu0 0.0
        %560 = vmatprep.subr.mxu0 0.0
        %561 = vmatpush2.msra.mxu0 0.0
        %562 = vmatprep.subr.mxu0 0.0
        %563 = vmatpush2.msra.mxu0 0.0
        %564 = vmatprep.subr.mxu0 0.0
        %565 = vmatpush2.msra.mxu0 0.0
        %566 = vmatprep.subr.mxu0 0.0
        %567 = vmatpush2.msra.mxu0 0.0
        %568 = vmatprep.subr.mxu0 0.0
        %569 = vmatpush2.msra.mxu0 0.0
        %570 = vmatprep.subr.mxu0 0.0
        %571 = vmatpush2.msra.mxu0 0.0
        %572 = vmatprep.mubr.f32.mxu0 0.0
        %573 = vmatmul.mubr.f32.gmra.mxu0 %v469
        %v574 = vpop.f32.mrf.mxu0
        %v575 = vadd.f32 %v506, %v574
        %v576 = vpop.f32.mrf.mxu0
        %577 = vmatprep.mubr.f32.mxu0 0.0
        %578 = vmatmul.mubr.f32.gmra.mxu0 %v470
        %v579 = vpop.f32.mrf.mxu0
        %v580 = vadd.f32 %v506, %v579
        %v581 = vpop.f32.mrf.mxu0
        %582 = vmatprep.mubr.f32.mxu0 0.0
        %583 = vmatmul.mubr.f32.gmra.mxu0 %v471
        %v584 = vpop.f32.mrf.mxu0
        %v585 = vadd.f32 %v506, %v584
        %v586 = vpop.f32.mrf.mxu0
        %587 = vmatprep.mubr.f32.mxu0 0.0
        %588 = vmatmul.mubr.f32.gmra.mxu0 %v472
        %v589 = vpop.f32.mrf.mxu0
        %v590 = vadd.f32 %v506, %v589
        %v591 = vpop.f32.mrf.mxu0
        %592 = vmatprep.mubr.f32.mxu0 0.0
        %593 = vmatmul.mubr.f32.gmra.mxu0 %v473
        %v594 = vpop.f32.mrf.mxu0
        %v595 = vadd.f32 %v506, %v594
        %v596 = vpop.f32.mrf.mxu0
        %597 = vmatprep.mubr.f32.mxu0 0.0
        %598 = vmatmul.mubr.f32.gmra.mxu0 %v474
        %v599 = vpop.f32.mrf.mxu0
        %v600 = vadd.f32 %v506, %v599
        %v601 = vpop.f32.mrf.mxu0
        %602 = vmatprep.mubr.f32.mxu0 0.0
        %603 = vmatmul.mubr.f32.gmra.mxu0 %v475
        %v604 = vpop.f32.mrf.mxu0
        %v605 = vadd.f32 %v506, %v604
        %v606 = vpop.f32.mrf.mxu0
        %607 = vmatprep.mubr.f32.mxu0 0.0
        %608 = vmatmul.mubr.f32.gmra.mxu0 %v476
        %v609 = vpop.f32.mrf.mxu0
        %v610 = vadd.f32 %v506, %v609
        %v611 = vpop.f32.mrf.mxu0
        %612 = vmatprep.mubr.f32.mxu0 0.0
        %613 = vmatmul.mubr.f32.gmra.mxu0 %v477
        %v614 = vpop.f32.mrf.mxu0
        %v615 = vadd.f32 %v506, %v614
        %v616 = vpop.f32.mrf.mxu0
        %617 = vmatprep.mubr.f32.mxu0 0.0
        %618 = vmatmul.mubr.f32.gmra.mxu0 %v478
        %v619 = vpop.f32.mrf.mxu0
        %v620 = vadd.f32 %v506, %v619
        %v621 = vpop.f32.mrf.mxu0
        %622 = vmatprep.mubr.f32.mxu0 0.0
        %623 = vmatmul.mubr.f32.gmra.mxu0 %v479
        %v624 = vpop.f32.mrf.mxu0
        %v625 = vadd.f32 %v506, %v624
        %v626 = vpop.f32.mrf.mxu0
        %627 = vmatprep.mubr.f32.mxu0 0.0
        %628 = vmatmul.mubr.f32.gmra.mxu0 %v480
        %v629 = vpop.f32.mrf.mxu0
        %v630 = vadd.f32 %v506, %v629
        %v631 = vpop.f32.mrf.mxu0
        %632 = vmatprep.mubr.f32.mxu0 0.0
        %633 = vmatmul.mubr.f32.gmra.mxu0 %v481
        %v634 = vpop.f32.mrf.mxu0
        %v635 = vadd.f32 %v506, %v634
        %v636 = vpop.f32.mrf.mxu0
        %637 = vmatprep.mubr.f32.mxu0 0.0
        %638 = vmatmul.mubr.f32.gmra.mxu0 %v482
        %v639 = vpop.f32.mrf.mxu0
        %v640 = vadd.f32 %v506, %v639
        %v641 = vpop.f32.mrf.mxu0
        %642 = vmatprep.mubr.f32.mxu0 0.0
        %643 = vmatmul.mubr.f32.gmra.mxu0 %v483
        %v644 = vpop.f32.mrf.mxu0
        %v645 = vadd.f32 %v506, %v644
        %v646 = vpop.f32.mrf.mxu0
        %647 = vmatprep.mubr.f32.mxu0 0.0
        %648 = vmatmul.mubr.f32.gmra.mxu0 %v484
        %v649 = vpop.f32.mrf.mxu0
        %v650 = vadd.f32 %v506, %v649
        %v651 = vpop.f32.mrf.mxu0
        %652 = vdwg.mxu0
        %v653 = vmax.f32 %v575, 0.0
        %v654 = vmax.f32 %v580, 0.0
        %v655 = vmax.f32 %v585, 0.0
        %v656 = vmax.f32 %v590, 0.0
        %v657 = vmax.f32 %v595, 0.0
        %v658 = vmax.f32 %v600, 0.0
        %v659 = vmax.f32 %v605, 0.0
        %v660 = vmax.f32 %v610, 0.0
        %v661 = vmax.f32 %v615, 0.0
        %v662 = vmax.f32 %v620, 0.0
        %v663 = vmax.f32 %v625, 0.0
        %v664 = vmax.f32 %v630, 0.0
        %v665 = vmax.f32 %v635, 0.0
        %v666 = vmax.f32 %v640, 0.0
        %v667 = vmax.f32 %v645, 0.0
        %v668 = vmax.f32 %v650, 0.0
        %s669 = scalar_lea.vmem [#allocation2], 128
        %v670 = vld [vmem:[%s669] sm:$0xff]
        %v671 = vld [vmem:[%s669 + $0x8] sm:$0xff]
        %v672 = vld [vmem:[%s669 + $0x10] sm:$0xff]
        %v673 = vld [vmem:[%s669 + $0x18] sm:$0xff]
        %v674 = vld [vmem:[%s669 + $0x20] sm:$0xff]
        %v675 = vld [vmem:[%s669 + $0x28] sm:$0xff]
        %v676 = vld [vmem:[%s669 + $0x30] sm:$0xff]
        %v677 = vld [vmem:[%s669 + $0x38] sm:$0xff]
        %v678 = vld [vmem:[%s669 + $0x40] sm:$0xff]
        %v679 = vld [vmem:[%s669 + $0x48] sm:$0xff]
        %v680 = vld [vmem:[%s669 + $0x50] sm:$0xff]
        %v681 = vld [vmem:[%s669 + $0x58] sm:$0xff]
        %v682 = vld [vmem:[%s669 + $0x60] sm:$0xff]
        %v683 = vld [vmem:[%s669 + $0x68] sm:$0xff]
        %v684 = vld [vmem:[%s669 + $0x70] sm:$0xff]
        %v685 = vld [vmem:[%s669 + $0x78] sm:$0xff]
        %s686 = scalar_lea.vmem %s4, 1
        %v687 = vld [vmem:[%s686] sm:$0x1]
        %v689 = vlaneseq
        %v690 = vshrl.u32 %v689, 7
        %v691 = vsub.s32 0, %v690
        %v692 = vrot.slane %v687, %v691
        %694 = vmatprep.subr.mxu0 0.0
        %695 = vmatpush1.msra.mxu0 %v685
        %696 = vmatprep.subr.mxu0 0.0
        %697 = vmatpush1.msra.mxu0 %v684
        %698 = vmatprep.subr.mxu0 0.0
        %699 = vmatpush1.msra.mxu0 %v683
        %700 = vmatprep.subr.mxu0 0.0
        %701 = vmatpush1.msra.mxu0 %v682
        %702 = vmatprep.subr.mxu0 0.0
        %703 = vmatpush1.msra.mxu0 %v681
        %704 = vmatprep.subr.mxu0 0.0
        %705 = vmatpush1.msra.mxu0 %v680
        %706 = vmatprep.subr.mxu0 0.0
        %707 = vmatpush1.msra.mxu0 %v679
        %708 = vmatprep.subr.mxu0 0.0
        %709 = vmatpush1.msra.mxu0 %v678
        %710 = vmatprep.subr.mxu0 0.0
        %711 = vmatpush1.msra.mxu0 %v677
        %712 = vmatprep.subr.mxu0 0.0
        %713 = vmatpush1.msra.mxu0 %v676
        %714 = vmatprep.subr.mxu0 0.0
        %715 = vmatpush1.msra.mxu0 %v675
        %716 = vmatprep.subr.mxu0 0.0
        %717 = vmatpush1.msra.mxu0 %v674
        %718 = vmatprep.subr.mxu0 0.0
        %719 = vmatpush1.msra.mxu0 %v673
        %720 = vmatprep.subr.mxu0 0.0
        %721 = vmatpush1.msra.mxu0 %v672
        %722 = vmatprep.subr.mxu0 0.0
        %723 = vmatpush1.msra.mxu0 %v671
        %724 = vmatprep.subr.mxu0 0.0
        %725 = vmatpush1.msra.mxu0 %v670
        %726 = vmatprep.subr.mxu0 0.0
        %727 = vmatpush2.msra.mxu0 0.0
        %728 = vmatprep.subr.mxu0 0.0
        %729 = vmatpush2.msra.mxu0 0.0
        %730 = vmatprep.subr.mxu0 0.0
        %731 = vmatpush2.msra.mxu0 0.0
        %732 = vmatprep.subr.mxu0 0.0
        %733 = vmatpush2.msra.mxu0 0.0
        %734 = vmatprep.subr.mxu0 0.0
        %735 = vmatpush2.msra.mxu0 0.0
        %736 = vmatprep.subr.mxu0 0.0
        %737 = vmatpush2.msra.mxu0 0.0
        %738 = vmatprep.subr.mxu0 0.0
        %739 = vmatpush2.msra.mxu0 0.0
        %740 = vmatprep.subr.mxu0 0.0
        %741 = vmatpush2.msra.mxu0 0.0
        %742 = vmatprep.subr.mxu0 0.0
        %743 = vmatpush2.msra.mxu0 0.0
        %744 = vmatprep.subr.mxu0 0.0
        %745 = vmatpush2.msra.mxu0 0.0
        %746 = vmatprep.subr.mxu0 0.0
        %747 = vmatpush2.msra.mxu0 0.0
        %748 = vmatprep.subr.mxu0 0.0
        %749 = vmatpush2.msra.mxu0 0.0
        %750 = vmatprep.subr.mxu0 0.0
        %751 = vmatpush2.msra.mxu0 0.0
        %752 = vmatprep.subr.mxu0 0.0
        %753 = vmatpush2.msra.mxu0 0.0
        %754 = vmatprep.subr.mxu0 0.0
        %755 = vmatpush2.msra.mxu0 0.0
        %756 = vmatprep.subr.mxu0 0.0
        %757 = vmatpush2.msra.mxu0 0.0
        %758 = vmatprep.mubr.f32.mxu0 0.0
        %759 = vmatmul.mubr.f32.gmra.mxu0 %v653
        %v760 = vpop.f32.mrf.mxu0
        %v761 = vadd.f32 %v692, %v760
        %v762 = vpop.f32.mrf.mxu0
        %763 = vmatprep.mubr.f32.mxu0 0.0
        %764 = vmatmul.mubr.f32.gmra.mxu0 %v654
        %v765 = vpop.f32.mrf.mxu0
        %v766 = vadd.f32 %v692, %v765
        %v767 = vpop.f32.mrf.mxu0
        %768 = vmatprep.mubr.f32.mxu0 0.0
        %769 = vmatmul.mubr.f32.gmra.mxu0 %v655
        %v770 = vpop.f32.mrf.mxu0
        %v771 = vadd.f32 %v692, %v770
        %v772 = vpop.f32.mrf.mxu0
        %773 = vmatprep.mubr.f32.mxu0 0.0
        %774 = vmatmul.mubr.f32.gmra.mxu0 %v656
        %v775 = vpop.f32.mrf.mxu0
        %v776 = vadd.f32 %v692, %v775
        %v777 = vpop.f32.mrf.mxu0
        %778 = vmatprep.mubr.f32.mxu0 0.0
        %779 = vmatmul.mubr.f32.gmra.mxu0 %v657
        %v780 = vpop.f32.mrf.mxu0
        %v781 = vadd.f32 %v692, %v780
        %v782 = vpop.f32.mrf.mxu0
        %783 = vmatprep.mubr.f32.mxu0 0.0
        %784 = vmatmul.mubr.f32.gmra.mxu0 %v658
        %v785 = vpop.f32.mrf.mxu0
        %v786 = vadd.f32 %v692, %v785
        %v787 = vpop.f32.mrf.mxu0
        %788 = vmatprep.mubr.f32.mxu0 0.0
        %789 = vmatmul.mubr.f32.gmra.mxu0 %v659
        %v790 = vpop.f32.mrf.mxu0
        %v791 = vadd.f32 %v692, %v790
        %v792 = vpop.f32.mrf.mxu0
        %793 = vmatprep.mubr.f32.mxu0 0.0
        %794 = vmatmul.mubr.f32.gmra.mxu0 %v660
        %v795 = vpop.f32.mrf.mxu0
        %v796 = vadd.f32 %v692, %v795
        %v797 = vpop.f32.mrf.mxu0
        %798 = vmatprep.mubr.f32.mxu0 0.0
        %799 = vmatmul.mubr.f32.gmra.mxu0 %v661
        %v800 = vpop.f32.mrf.mxu0
        %v801 = vadd.f32 %v692, %v800
        %v802 = vpop.f32.mrf.mxu0
        %803 = vmatprep.mubr.f32.mxu0 0.0
        %804 = vmatmul.mubr.f32.gmra.mxu0 %v662
        %v805 = vpop.f32.mrf.mxu0
        %v806 = vadd.f32 %v692, %v805
        %v807 = vpop.f32.mrf.mxu0
        %808 = vmatprep.mubr.f32.mxu0 0.0
        %809 = vmatmul.mubr.f32.gmra.mxu0 %v663
        %v810 = vpop.f32.mrf.mxu0
        %v811 = vadd.f32 %v692, %v810
        %v812 = vpop.f32.mrf.mxu0
        %813 = vmatprep.mubr.f32.mxu0 0.0
        %814 = vmatmul.mubr.f32.gmra.mxu0 %v664
        %v815 = vpop.f32.mrf.mxu0
        %v816 = vadd.f32 %v692, %v815
        %v817 = vpop.f32.mrf.mxu0
        %818 = vmatprep.mubr.f32.mxu0 0.0
        %819 = vmatmul.mubr.f32.gmra.mxu0 %v665
        %v820 = vpop.f32.mrf.mxu0
        %v821 = vadd.f32 %v692, %v820
        %v822 = vpop.f32.mrf.mxu0
        %823 = vmatprep.mubr.f32.mxu0 0.0
        %824 = vmatmul.mubr.f32.gmra.mxu0 %v666
        %v825 = vpop.f32.mrf.mxu0
        %v826 = vadd.f32 %v692, %v825
        %v827 = vpop.f32.mrf.mxu0
        %828 = vmatprep.mubr.f32.mxu0 0.0
        %829 = vmatmul.mubr.f32.gmra.mxu0 %v667
        %v830 = vpop.f32.mrf.mxu0
        %v831 = vadd.f32 %v692, %v830
        %v832 = vpop.f32.mrf.mxu0
        %833 = vmatprep.mubr.f32.mxu0 0.0
        %834 = vmatmul.mubr.f32.gmra.mxu0 %v668
        %v835 = vpop.f32.mrf.mxu0
        %v836 = vadd.f32 %v692, %v835
        %v837 = vpop.f32.mrf.mxu0
        %838 = vdwg.mxu0
        %v839 = vmax.f32 %v761, 0.0
        %v840 = vmax.f32 %v766, 0.0
        %v841 = vmax.f32 %v771, 0.0
        %v842 = vmax.f32 %v776, 0.0
        %v843 = vmax.f32 %v781, 0.0
        %v844 = vmax.f32 %v786, 0.0
        %v845 = vmax.f32 %v791, 0.0
        %v846 = vmax.f32 %v796, 0.0
        %v847 = vmax.f32 %v801, 0.0
        %v848 = vmax.f32 %v806, 0.0
        %v849 = vmax.f32 %v811, 0.0
        %v850 = vmax.f32 %v816, 0.0
        %v851 = vmax.f32 %v821, 0.0
        %v852 = vmax.f32 %v826, 0.0
        %v853 = vmax.f32 %v831, 0.0
        %v854 = vmax.f32 %v836, 0.0
        %s855 = scalar_lea.vmem [#allocation2], 256
        %v856 = vld [vmem:[%s855] sm:$0xff]
        %v857 = vld [vmem:[%s855 + $0x8] sm:$0xff]
        %v858 = vld [vmem:[%s855 + $0x10] sm:$0xff]
        %v859 = vld [vmem:[%s855 + $0x18] sm:$0xff]
        %v860 = vld [vmem:[%s855 + $0x20] sm:$0xff]
        %v861 = vld [vmem:[%s855 + $0x28] sm:$0xff]
        %v862 = vld [vmem:[%s855 + $0x30] sm:$0xff]
        %v863 = vld [vmem:[%s855 + $0x38] sm:$0xff]
        %v864 = vld [vmem:[%s855 + $0x40] sm:$0xff]
        %v865 = vld [vmem:[%s855 + $0x48] sm:$0xff]
        %v866 = vld [vmem:[%s855 + $0x50] sm:$0xff]
        %v867 = vld [vmem:[%s855 + $0x58] sm:$0xff]
        %v868 = vld [vmem:[%s855 + $0x60] sm:$0xff]
        %v869 = vld [vmem:[%s855 + $0x68] sm:$0xff]
        %v870 = vld [vmem:[%s855 + $0x70] sm:$0xff]
        %v871 = vld [vmem:[%s855 + $0x78] sm:$0xff]
        %s872 = scalar_lea.vmem %s4, 2
        %v873 = vld [vmem:[%s872] sm:$0x1]
        %v875 = vlaneseq
        %v876 = vshrl.u32 %v875, 7
        %v877 = vsub.s32 0, %v876
        %v878 = vrot.slane %v873, %v877
        %880 = vmatprep.subr.mxu0 0.0
        %881 = vmatpush1.msra.mxu0 %v871
        %882 = vmatprep.subr.mxu0 0.0
        %883 = vmatpush1.msra.mxu0 %v870
        %884 = vmatprep.subr.mxu0 0.0
        %885 = vmatpush1.msra.mxu0 %v869
        %886 = vmatprep.subr.mxu0 0.0
        %887 = vmatpush1.msra.mxu0 %v868
        %888 = vmatprep.subr.mxu0 0.0
        %889 = vmatpush1.msra.mxu0 %v867
        %890 = vmatprep.subr.mxu0 0.0
        %891 = vmatpush1.msra.mxu0 %v866
        %892 = vmatprep.subr.mxu0 0.0
        %893 = vmatpush1.msra.mxu0 %v865
        %894 = vmatprep.subr.mxu0 0.0
        %895 = vmatpush1.msra.mxu0 %v864
        %896 = vmatprep.subr.mxu0 0.0
        %897 = vmatpush1.msra.mxu0 %v863
        %898 = vmatprep.subr.mxu0 0.0
        %899 = vmatpush1.msra.mxu0 %v862
        %900 = vmatprep.subr.mxu0 0.0
        %901 = vmatpush1.msra.mxu0 %v861
        %902 = vmatprep.subr.mxu0 0.0
        %903 = vmatpush1.msra.mxu0 %v860
        %904 = vmatprep.subr.mxu0 0.0
        %905 = vmatpush1.msra.mxu0 %v859
        %906 = vmatprep.subr.mxu0 0.0
        %907 = vmatpush1.msra.mxu0 %v858
        %908 = vmatprep.subr.mxu0 0.0
        %909 = vmatpush1.msra.mxu0 %v857
        %910 = vmatprep.subr.mxu0 0.0
        %911 = vmatpush1.msra.mxu0 %v856
        %912 = vmatprep.subr.mxu0 0.0
        %913 = vmatpush2.msra.mxu0 0.0
        %914 = vmatprep.subr.mxu0 0.0
        %915 = vmatpush2.msra.mxu0 0.0
        %916 = vmatprep.subr.mxu0 0.0
        %917 = vmatpush2.msra.mxu0 0.0
        %918 = vmatprep.subr.mxu0 0.0
        %919 = vmatpush2.msra.mxu0 0.0
        %920 = vmatprep.subr.mxu0 0.0
        %921 = vmatpush2.msra.mxu0 0.0
        %922 = vmatprep.subr.mxu0 0.0
        %923 = vmatpush2.msra.mxu0 0.0
        %924 = vmatprep.subr.mxu0 0.0
        %925 = vmatpush2.msra.mxu0 0.0
        %926 = vmatprep.subr.mxu0 0.0
        %927 = vmatpush2.msra.mxu0 0.0
        %928 = vmatprep.subr.mxu0 0.0
        %929 = vmatpush2.msra.mxu0 0.0
        %930 = vmatprep.subr.mxu0 0.0
        %931 = vmatpush2.msra.mxu0 0.0
        %932 = vmatprep.subr.mxu0 0.0
        %933 = vmatpush2.msra.mxu0 0.0
        %934 = vmatprep.subr.mxu0 0.0
        %935 = vmatpush2.msra.mxu0 0.0
        %936 = vmatprep.subr.mxu0 0.0
        %937 = vmatpush2.msra.mxu0 0.0
        %938 = vmatprep.subr.mxu0 0.0
        %939 = vmatpush2.msra.mxu0 0.0
        %940 = vmatprep.subr.mxu0 0.0
        %941 = vmatpush2.msra.mxu0 0.0
        %942 = vmatprep.subr.mxu0 0.0
        %943 = vmatpush2.msra.mxu0 0.0
        %944 = vmatprep.mubr.f32.mxu0 0.0
        %945 = vmatmul.mubr.f32.gmra.mxu0 %v839
        %v946 = vpop.f32.mrf.mxu0
        %v947 = vadd.f32 %v878, %v946
        %v948 = vpop.f32.mrf.mxu0
        %949 = vmatprep.mubr.f32.mxu0 0.0
        %950 = vmatmul.mubr.f32.gmra.mxu0 %v840
        %v951 = vpop.f32.mrf.mxu0
        %v952 = vadd.f32 %v878, %v951
        %v953 = vpop.f32.mrf.mxu0
        %954 = vmatprep.mubr.f32.mxu0 0.0
        %955 = vmatmul.mubr.f32.gmra.mxu0 %v841
        %v956 = vpop.f32.mrf.mxu0
        %v957 = vadd.f32 %v878, %v956
        %v958 = vpop.f32.mrf.mxu0
        %959 = vmatprep.mubr.f32.mxu0 0.0
        %960 = vmatmul.mubr.f32.gmra.mxu0 %v842
        %v961 = vpop.f32.mrf.mxu0
        %v962 = vadd.f32 %v878, %v961
        %v963 = vpop.f32.mrf.mxu0
        %964 = vmatprep.mubr.f32.mxu0 0.0
        %965 = vmatmul.mubr.f32.gmra.mxu0 %v843
        %v966 = vpop.f32.mrf.mxu0
        %v967 = vadd.f32 %v878, %v966
        %v968 = vpop.f32.mrf.mxu0
        %969 = vmatprep.mubr.f32.mxu0 0.0
        %970 = vmatmul.mubr.f32.gmra.mxu0 %v844
        %v971 = vpop.f32.mrf.mxu0
        %v972 = vadd.f32 %v878, %v971
        %v973 = vpop.f32.mrf.mxu0
        %974 = vmatprep.mubr.f32.mxu0 0.0
        %975 = vmatmul.mubr.f32.gmra.mxu0 %v845
        %v976 = vpop.f32.mrf.mxu0
        %v977 = vadd.f32 %v878, %v976
        %v978 = vpop.f32.mrf.mxu0
        %979 = vmatprep.mubr.f32.mxu0 0.0
        %980 = vmatmul.mubr.f32.gmra.mxu0 %v846
        %v981 = vpop.f32.mrf.mxu0
        %v982 = vadd.f32 %v878, %v981
        %v983 = vpop.f32.mrf.mxu0
        %984 = vmatprep.mubr.f32.mxu0 0.0
        %985 = vmatmul.mubr.f32.gmra.mxu0 %v847
        %v986 = vpop.f32.mrf.mxu0
        %v987 = vadd.f32 %v878, %v986
        %v988 = vpop.f32.mrf.mxu0
        %989 = vmatprep.mubr.f32.mxu0 0.0
        %990 = vmatmul.mubr.f32.gmra.mxu0 %v848
        %v991 = vpop.f32.mrf.mxu0
        %v992 = vadd.f32 %v878, %v991
        %v993 = vpop.f32.mrf.mxu0
        %994 = vmatprep.mubr.f32.mxu0 0.0
        %995 = vmatmul.mubr.f32.gmra.mxu0 %v849
        %v996 = vpop.f32.mrf.mxu0
        %v997 = vadd.f32 %v878, %v996
        %v998 = vpop.f32.mrf.mxu0
        %999 = vmatprep.mubr.f32.mxu0 0.0
        %1000 = vmatmul.mubr.f32.gmra.mxu0 %v850
        %v1001 = vpop.f32.mrf.mxu0
        %v1002 = vadd.f32 %v878, %v1001
        %v1003 = vpop.f32.mrf.mxu0
        %1004 = vmatprep.mubr.f32.mxu0 0.0
        %1005 = vmatmul.mubr.f32.gmra.mxu0 %v851
        %v1006 = vpop.f32.mrf.mxu0
        %v1007 = vadd.f32 %v878, %v1006
        %v1008 = vpop.f32.mrf.mxu0
        %1009 = vmatprep.mubr.f32.mxu0 0.0
        %1010 = vmatmul.mubr.f32.gmra.mxu0 %v852
        %v1011 = vpop.f32.mrf.mxu0
        %v1012 = vadd.f32 %v878, %v1011
        %v1013 = vpop.f32.mrf.mxu0
        %1014 = vmatprep.mubr.f32.mxu0 0.0
        %1015 = vmatmul.mubr.f32.gmra.mxu0 %v853
        %v1016 = vpop.f32.mrf.mxu0
        %v1017 = vadd.f32 %v878, %v1016
        %v1018 = vpop.f32.mrf.mxu0
        %1019 = vmatprep.mubr.f32.mxu0 0.0
        %1020 = vmatmul.mubr.f32.gmra.mxu0 %v854
        %v1021 = vpop.f32.mrf.mxu0
        %v1022 = vadd.f32 %v878, %v1021
        %v1023 = vpop.f32.mrf.mxu0
        %1024 = vdwg.mxu0
        %v1025 = vmax.f32 %v947, 0.0
        %v1026 = vmax.f32 %v952, 0.0
        %v1027 = vmax.f32 %v957, 0.0
        %v1028 = vmax.f32 %v962, 0.0
        %v1029 = vmax.f32 %v967, 0.0
        %v1030 = vmax.f32 %v972, 0.0
        %v1031 = vmax.f32 %v977, 0.0
        %v1032 = vmax.f32 %v982, 0.0
        %v1033 = vmax.f32 %v987, 0.0
        %v1034 = vmax.f32 %v992, 0.0
        %v1035 = vmax.f32 %v997, 0.0
        %v1036 = vmax.f32 %v1002, 0.0
        %v1037 = vmax.f32 %v1007, 0.0
        %v1038 = vmax.f32 %v1012, 0.0
        %v1039 = vmax.f32 %v1017, 0.0
        %v1040 = vmax.f32 %v1022, 0.0
        %s1041 = scalar_lea.vmem [#allocation2], 384
        %v1042 = vld [vmem:[%s1041] sm:$0xff]
        %v1043 = vld [vmem:[%s1041 + $0x8] sm:$0xff]
        %v1044 = vld [vmem:[%s1041 + $0x10] sm:$0xff]
        %v1045 = vld [vmem:[%s1041 + $0x18] sm:$0xff]
        %v1046 = vld [vmem:[%s1041 + $0x20] sm:$0xff]
        %v1047 = vld [vmem:[%s1041 + $0x28] sm:$0xff]
        %v1048 = vld [vmem:[%s1041 + $0x30] sm:$0xff]
        %v1049 = vld [vmem:[%s1041 + $0x38] sm:$0xff]
        %v1050 = vld [vmem:[%s1041 + $0x40] sm:$0xff]
        %v1051 = vld [vmem:[%s1041 + $0x48] sm:$0xff]
        %v1052 = vld [vmem:[%s1041 + $0x50] sm:$0xff]
        %v1053 = vld [vmem:[%s1041 + $0x58] sm:$0xff]
        %v1054 = vld [vmem:[%s1041 + $0x60] sm:$0xff]
        %v1055 = vld [vmem:[%s1041 + $0x68] sm:$0xff]
        %v1056 = vld [vmem:[%s1041 + $0x70] sm:$0xff]
        %v1057 = vld [vmem:[%s1041 + $0x78] sm:$0xff]
        %s1058 = scalar_lea.vmem %s4, 3
        %v1059 = vld [vmem:[%s1058] sm:$0x1]
        %v1061 = vlaneseq
        %v1062 = vshrl.u32 %v1061, 7
        %v1063 = vsub.s32 0, %v1062
        %v1064 = vrot.slane %v1059, %v1063
        %1066 = vmatprep.subr.mxu0 0.0
        %1067 = vmatpush1.msra.mxu0 %v1057
        %1068 = vmatprep.subr.mxu0 0.0
        %1069 = vmatpush1.msra.mxu0 %v1056
        %1070 = vmatprep.subr.mxu0 0.0
        %1071 = vmatpush1.msra.mxu0 %v1055
        %1072 = vmatprep.subr.mxu0 0.0
        %1073 = vmatpush1.msra.mxu0 %v1054
        %1074 = vmatprep.subr.mxu0 0.0
        %1075 = vmatpush1.msra.mxu0 %v1053
        %1076 = vmatprep.subr.mxu0 0.0
        %1077 = vmatpush1.msra.mxu0 %v1052
        %1078 = vmatprep.subr.mxu0 0.0
        %1079 = vmatpush1.msra.mxu0 %v1051
        %1080 = vmatprep.subr.mxu0 0.0
        %1081 = vmatpush1.msra.mxu0 %v1050
        %1082 = vmatprep.subr.mxu0 0.0
        %1083 = vmatpush1.msra.mxu0 %v1049
        %1084 = vmatprep.subr.mxu0 0.0
        %1085 = vmatpush1.msra.mxu0 %v1048
        %1086 = vmatprep.subr.mxu0 0.0
        %1087 = vmatpush1.msra.mxu0 %v1047
        %1088 = vmatprep.subr.mxu0 0.0
        %1089 = vmatpush1.msra.mxu0 %v1046
        %1090 = vmatprep.subr.mxu0 0.0
        %1091 = vmatpush1.msra.mxu0 %v1045
        %1092 = vmatprep.subr.mxu0 0.0
        %1093 = vmatpush1.msra.mxu0 %v1044
        %1094 = vmatprep.subr.mxu0 0.0
        %1095 = vmatpush1.msra.mxu0 %v1043
        %1096 = vmatprep.subr.mxu0 0.0
        %1097 = vmatpush1.msra.mxu0 %v1042
        %1098 = vmatprep.subr.mxu0 0.0
        %1099 = vmatpush2.msra.mxu0 0.0
        %1100 = vmatprep.subr.mxu0 0.0
        %1101 = vmatpush2.msra.mxu0 0.0
        %1102 = vmatprep.subr.mxu0 0.0
        %1103 = vmatpush2.msra.mxu0 0.0
        %1104 = vmatprep.subr.mxu0 0.0
        %1105 = vmatpush2.msra.mxu0 0.0
        %1106 = vmatprep.subr.mxu0 0.0
        %1107 = vmatpush2.msra.mxu0 0.0
        %1108 = vmatprep.subr.mxu0 0.0
        %1109 = vmatpush2.msra.mxu0 0.0
        %1110 = vmatprep.subr.mxu0 0.0
        %1111 = vmatpush2.msra.mxu0 0.0
        %1112 = vmatprep.subr.mxu0 0.0
        %1113 = vmatpush2.msra.mxu0 0.0
        %1114 = vmatprep.subr.mxu0 0.0
        %1115 = vmatpush2.msra.mxu0 0.0
        %1116 = vmatprep.subr.mxu0 0.0
        %1117 = vmatpush2.msra.mxu0 0.0
        %1118 = vmatprep.subr.mxu0 0.0
        %1119 = vmatpush2.msra.mxu0 0.0
        %1120 = vmatprep.subr.mxu0 0.0
        %1121 = vmatpush2.msra.mxu0 0.0
        %1122 = vmatprep.subr.mxu0 0.0
        %1123 = vmatpush2.msra.mxu0 0.0
        %1124 = vmatprep.subr.mxu0 0.0
        %1125 = vmatpush2.msra.mxu0 0.0
        %1126 = vmatprep.subr.mxu0 0.0
        %1127 = vmatpush2.msra.mxu0 0.0
        %1128 = vmatprep.subr.mxu0 0.0
        %1129 = vmatpush2.msra.mxu0 0.0
        %1130 = vmatprep.mubr.f32.mxu0 0.0
        %1131 = vmatmul.mubr.f32.gmra.mxu0 %v1025
        %v1132 = vpop.f32.mrf.mxu0
        %v1133 = vadd.f32 %v1064, %v1132
        %v1134 = vpop.f32.mrf.mxu0
        %1135 = vmatprep.mubr.f32.mxu0 0.0
        %1136 = vmatmul.mubr.f32.gmra.mxu0 %v1026
        %v1137 = vpop.f32.mrf.mxu0
        %v1138 = vadd.f32 %v1064, %v1137
        %v1139 = vpop.f32.mrf.mxu0
        %1140 = vmatprep.mubr.f32.mxu0 0.0
        %1141 = vmatmul.mubr.f32.gmra.mxu0 %v1027
        %v1142 = vpop.f32.mrf.mxu0
        %v1143 = vadd.f32 %v1064, %v1142
        %v1144 = vpop.f32.mrf.mxu0
        %1145 = vmatprep.mubr.f32.mxu0 0.0
        %1146 = vmatmul.mubr.f32.gmra.mxu0 %v1028
        %v1147 = vpop.f32.mrf.mxu0
        %v1148 = vadd.f32 %v1064, %v1147
        %v1149 = vpop.f32.mrf.mxu0
        %1150 = vmatprep.mubr.f32.mxu0 0.0
        %1151 = vmatmul.mubr.f32.gmra.mxu0 %v1029
        %v1152 = vpop.f32.mrf.mxu0
        %v1153 = vadd.f32 %v1064, %v1152
        %v1154 = vpop.f32.mrf.mxu0
        %1155 = vmatprep.mubr.f32.mxu0 0.0
        %1156 = vmatmul.mubr.f32.gmra.mxu0 %v1030
        %v1157 = vpop.f32.mrf.mxu0
        %v1158 = vadd.f32 %v1064, %v1157
        %v1159 = vpop.f32.mrf.mxu0
        %1160 = vmatprep.mubr.f32.mxu0 0.0
        %1161 = vmatmul.mubr.f32.gmra.mxu0 %v1031
        %v1162 = vpop.f32.mrf.mxu0
        %v1163 = vadd.f32 %v1064, %v1162
        %v1164 = vpop.f32.mrf.mxu0
        %1165 = vmatprep.mubr.f32.mxu0 0.0
        %1166 = vmatmul.mubr.f32.gmra.mxu0 %v1032
        %v1167 = vpop.f32.mrf.mxu0
        %v1168 = vadd.f32 %v1064, %v1167
        %v1169 = vpop.f32.mrf.mxu0
        %1170 = vmatprep.mubr.f32.mxu0 0.0
        %1171 = vmatmul.mubr.f32.gmra.mxu0 %v1033
        %v1172 = vpop.f32.mrf.mxu0
        %v1173 = vadd.f32 %v1064, %v1172
        %v1174 = vpop.f32.mrf.mxu0
        %1175 = vmatprep.mubr.f32.mxu0 0.0
        %1176 = vmatmul.mubr.f32.gmra.mxu0 %v1034
        %v1177 = vpop.f32.mrf.mxu0
        %v1178 = vadd.f32 %v1064, %v1177
        %v1179 = vpop.f32.mrf.mxu0
        %1180 = vmatprep.mubr.f32.mxu0 0.0
        %1181 = vmatmul.mubr.f32.gmra.mxu0 %v1035
        %v1182 = vpop.f32.mrf.mxu0
        %v1183 = vadd.f32 %v1064, %v1182
        %v1184 = vpop.f32.mrf.mxu0
        %1185 = vmatprep.mubr.f32.mxu0 0.0
        %1186 = vmatmul.mubr.f32.gmra.mxu0 %v1036
        %v1187 = vpop.f32.mrf.mxu0
        %v1188 = vadd.f32 %v1064, %v1187
        %v1189 = vpop.f32.mrf.mxu0
        %1190 = vmatprep.mubr.f32.mxu0 0.0
        %1191 = vmatmul.mubr.f32.gmra.mxu0 %v1037
        %v1192 = vpop.f32.mrf.mxu0
        %v1193 = vadd.f32 %v1064, %v1192
        %v1194 = vpop.f32.mrf.mxu0
        %1195 = vmatprep.mubr.f32.mxu0 0.0
        %1196 = vmatmul.mubr.f32.gmra.mxu0 %v1038
        %v1197 = vpop.f32.mrf.mxu0
        %v1198 = vadd.f32 %v1064, %v1197
        %v1199 = vpop.f32.mrf.mxu0
        %1200 = vmatprep.mubr.f32.mxu0 0.0
        %1201 = vmatmul.mubr.f32.gmra.mxu0 %v1039
        %v1202 = vpop.f32.mrf.mxu0
        %v1203 = vadd.f32 %v1064, %v1202
        %v1204 = vpop.f32.mrf.mxu0
        %1205 = vmatprep.mubr.f32.mxu0 0.0
        %1206 = vmatmul.mubr.f32.gmra.mxu0 %v1040
        %v1207 = vpop.f32.mrf.mxu0
        %v1208 = vadd.f32 %v1064, %v1207
        %v1209 = vpop.f32.mrf.mxu0
        %1210 = vdwg.mxu0
        %v1211 = vmax.f32 %v1133, 0.0
        %v1212 = vmax.f32 %v1138, 0.0
        %v1213 = vmax.f32 %v1143, 0.0
        %v1214 = vmax.f32 %v1148, 0.0
        %v1215 = vmax.f32 %v1153, 0.0
        %v1216 = vmax.f32 %v1158, 0.0
        %v1217 = vmax.f32 %v1163, 0.0
        %v1218 = vmax.f32 %v1168, 0.0
        %v1219 = vmax.f32 %v1173, 0.0
        %v1220 = vmax.f32 %v1178, 0.0
        %v1221 = vmax.f32 %v1183, 0.0
        %v1222 = vmax.f32 %v1188, 0.0
        %v1223 = vmax.f32 %v1193, 0.0
        %v1224 = vmax.f32 %v1198, 0.0
        %v1225 = vmax.f32 %v1203, 0.0
        %v1226 = vmax.f32 %v1208, 0.0
        %s1227 = scalar_lea.vmem [#allocation2], 512
        %v1228 = vld [vmem:[%s1227] sm:$0xff]
        %v1229 = vld [vmem:[%s1227 + $0x8] sm:$0xff]
        %v1230 = vld [vmem:[%s1227 + $0x10] sm:$0xff]
        %v1231 = vld [vmem:[%s1227 + $0x18] sm:$0xff]
        %v1232 = vld [vmem:[%s1227 + $0x20] sm:$0xff]
        %v1233 = vld [vmem:[%s1227 + $0x28] sm:$0xff]
        %v1234 = vld [vmem:[%s1227 + $0x30] sm:$0xff]
        %v1235 = vld [vmem:[%s1227 + $0x38] sm:$0xff]
        %v1236 = vld [vmem:[%s1227 + $0x40] sm:$0xff]
        %v1237 = vld [vmem:[%s1227 + $0x48] sm:$0xff]
        %v1238 = vld [vmem:[%s1227 + $0x50] sm:$0xff]
        %v1239 = vld [vmem:[%s1227 + $0x58] sm:$0xff]
        %v1240 = vld [vmem:[%s1227 + $0x60] sm:$0xff]
        %v1241 = vld [vmem:[%s1227 + $0x68] sm:$0xff]
        %v1242 = vld [vmem:[%s1227 + $0x70] sm:$0xff]
        %v1243 = vld [vmem:[%s1227 + $0x78] sm:$0xff]
        %s1244 = scalar_lea.vmem %s4, 4
        %v1245 = vld [vmem:[%s1244] sm:$0x1]
        %v1247 = vlaneseq
        %v1248 = vshrl.u32 %v1247, 7
        %v1249 = vsub.s32 0, %v1248
        %v1250 = vrot.slane %v1245, %v1249
        %1252 = vmatprep.subr.mxu0 0.0
        %1253 = vmatpush1.msra.mxu0 %v1243
        %1254 = vmatprep.subr.mxu0 0.0
        %1255 = vmatpush1.msra.mxu0 %v1242
        %1256 = vmatprep.subr.mxu0 0.0
        %1257 = vmatpush1.msra.mxu0 %v1241
        %1258 = vmatprep.subr.mxu0 0.0
        %1259 = vmatpush1.msra.mxu0 %v1240
        %1260 = vmatprep.subr.mxu0 0.0
        %1261 = vmatpush1.msra.mxu0 %v1239
        %1262 = vmatprep.subr.mxu0 0.0
        %1263 = vmatpush1.msra.mxu0 %v1238
        %1264 = vmatprep.subr.mxu0 0.0
        %1265 = vmatpush1.msra.mxu0 %v1237
        %1266 = vmatprep.subr.mxu0 0.0
        %1267 = vmatpush1.msra.mxu0 %v1236
        %1268 = vmatprep.subr.mxu0 0.0
        %1269 = vmatpush1.msra.mxu0 %v1235
        %1270 = vmatprep.subr.mxu0 0.0
        %1271 = vmatpush1.msra.mxu0 %v1234
        %1272 = vmatprep.subr.mxu0 0.0
        %1273 = vmatpush1.msra.mxu0 %v1233
        %1274 = vmatprep.subr.mxu0 0.0
        %1275 = vmatpush1.msra.mxu0 %v1232
        %1276 = vmatprep.subr.mxu0 0.0
        %1277 = vmatpush1.msra.mxu0 %v1231
        %1278 = vmatprep.subr.mxu0 0.0
        %1279 = vmatpush1.msra.mxu0 %v1230
        %1280 = vmatprep.subr.mxu0 0.0
        %1281 = vmatpush1.msra.mxu0 %v1229
        %1282 = vmatprep.subr.mxu0 0.0
        %1283 = vmatpush1.msra.mxu0 %v1228
        %1284 = vmatprep.subr.mxu0 0.0
        %1285 = vmatpush2.msra.mxu0 0.0
        %1286 = vmatprep.subr.mxu0 0.0
        %1287 = vmatpush2.msra.mxu0 0.0
        %1288 = vmatprep.subr.mxu0 0.0
        %1289 = vmatpush2.msra.mxu0 0.0
        %1290 = vmatprep.subr.mxu0 0.0
        %1291 = vmatpush2.msra.mxu0 0.0
        %1292 = vmatprep.subr.mxu0 0.0
        %1293 = vmatpush2.msra.mxu0 0.0
        %1294 = vmatprep.subr.mxu0 0.0
        %1295 = vmatpush2.msra.mxu0 0.0
        %1296 = vmatprep.subr.mxu0 0.0
        %1297 = vmatpush2.msra.mxu0 0.0
        %1298 = vmatprep.subr.mxu0 0.0
        %1299 = vmatpush2.msra.mxu0 0.0
        %1300 = vmatprep.subr.mxu0 0.0
        %1301 = vmatpush2.msra.mxu0 0.0
        %1302 = vmatprep.subr.mxu0 0.0
        %1303 = vmatpush2.msra.mxu0 0.0
        %1304 = vmatprep.subr.mxu0 0.0
        %1305 = vmatpush2.msra.mxu0 0.0
        %1306 = vmatprep.subr.mxu0 0.0
        %1307 = vmatpush2.msra.mxu0 0.0
        %1308 = vmatprep.subr.mxu0 0.0
        %1309 = vmatpush2.msra.mxu0 0.0
        %1310 = vmatprep.subr.mxu0 0.0
        %1311 = vmatpush2.msra.mxu0 0.0
        %1312 = vmatprep.subr.mxu0 0.0
        %1313 = vmatpush2.msra.mxu0 0.0
        %1314 = vmatprep.subr.mxu0 0.0
        %1315 = vmatpush2.msra.mxu0 0.0
        %1316 = vmatprep.mubr.f32.mxu0 0.0
        %1317 = vmatmul.mubr.f32.gmra.mxu0 %v1211
        %v1318 = vpop.f32.mrf.mxu0
        %v1319 = vadd.f32 %v1250, %v1318
        %v1320 = vpop.f32.mrf.mxu0
        %1321 = vmatprep.mubr.f32.mxu0 0.0
        %1322 = vmatmul.mubr.f32.gmra.mxu0 %v1212
        %v1323 = vpop.f32.mrf.mxu0
        %v1324 = vadd.f32 %v1250, %v1323
        %v1325 = vpop.f32.mrf.mxu0
        %1326 = vmatprep.mubr.f32.mxu0 0.0
        %1327 = vmatmul.mubr.f32.gmra.mxu0 %v1213
        %v1328 = vpop.f32.mrf.mxu0
        %v1329 = vadd.f32 %v1250, %v1328
        %v1330 = vpop.f32.mrf.mxu0
        %1331 = vmatprep.mubr.f32.mxu0 0.0
        %1332 = vmatmul.mubr.f32.gmra.mxu0 %v1214
        %v1333 = vpop.f32.mrf.mxu0
        %v1334 = vadd.f32 %v1250, %v1333
        %v1335 = vpop.f32.mrf.mxu0
        %1336 = vmatprep.mubr.f32.mxu0 0.0
        %1337 = vmatmul.mubr.f32.gmra.mxu0 %v1215
        %v1338 = vpop.f32.mrf.mxu0
        %v1339 = vadd.f32 %v1250, %v1338
        %v1340 = vpop.f32.mrf.mxu0
        %1341 = vmatprep.mubr.f32.mxu0 0.0
        %1342 = vmatmul.mubr.f32.gmra.mxu0 %v1216
        %v1343 = vpop.f32.mrf.mxu0
        %v1344 = vadd.f32 %v1250, %v1343
        %v1345 = vpop.f32.mrf.mxu0
        %1346 = vmatprep.mubr.f32.mxu0 0.0
        %1347 = vmatmul.mubr.f32.gmra.mxu0 %v1217
        %v1348 = vpop.f32.mrf.mxu0
        %v1349 = vadd.f32 %v1250, %v1348
        %v1350 = vpop.f32.mrf.mxu0
        %1351 = vmatprep.mubr.f32.mxu0 0.0
        %1352 = vmatmul.mubr.f32.gmra.mxu0 %v1218
        %v1353 = vpop.f32.mrf.mxu0
        %v1354 = vadd.f32 %v1250, %v1353
        %v1355 = vpop.f32.mrf.mxu0
        %1356 = vmatprep.mubr.f32.mxu0 0.0
        %1357 = vmatmul.mubr.f32.gmra.mxu0 %v1219
        %v1358 = vpop.f32.mrf.mxu0
        %v1359 = vadd.f32 %v1250, %v1358
        %v1360 = vpop.f32.mrf.mxu0
        %1361 = vmatprep.mubr.f32.mxu0 0.0
        %1362 = vmatmul.mubr.f32.gmra.mxu0 %v1220
        %v1363 = vpop.f32.mrf.mxu0
        %v1364 = vadd.f32 %v1250, %v1363
        %v1365 = vpop.f32.mrf.mxu0
        %1366 = vmatprep.mubr.f32.mxu0 0.0
        %1367 = vmatmul.mubr.f32.gmra.mxu0 %v1221
        %v1368 = vpop.f32.mrf.mxu0
        %v1369 = vadd.f32 %v1250, %v1368
        %v1370 = vpop.f32.mrf.mxu0
        %1371 = vmatprep.mubr.f32.mxu0 0.0
        %1372 = vmatmul.mubr.f32.gmra.mxu0 %v1222
        %v1373 = vpop.f32.mrf.mxu0
        %v1374 = vadd.f32 %v1250, %v1373
        %v1375 = vpop.f32.mrf.mxu0
        %1376 = vmatprep.mubr.f32.mxu0 0.0
        %1377 = vmatmul.mubr.f32.gmra.mxu0 %v1223
        %v1378 = vpop.f32.mrf.mxu0
        %v1379 = vadd.f32 %v1250, %v1378
        %v1380 = vpop.f32.mrf.mxu0
        %1381 = vmatprep.mubr.f32.mxu0 0.0
        %1382 = vmatmul.mubr.f32.gmra.mxu0 %v1224
        %v1383 = vpop.f32.mrf.mxu0
        %v1384 = vadd.f32 %v1250, %v1383
        %v1385 = vpop.f32.mrf.mxu0
        %1386 = vmatprep.mubr.f32.mxu0 0.0
        %1387 = vmatmul.mubr.f32.gmra.mxu0 %v1225
        %v1388 = vpop.f32.mrf.mxu0
        %v1389 = vadd.f32 %v1250, %v1388
        %v1390 = vpop.f32.mrf.mxu0
        %1391 = vmatprep.mubr.f32.mxu0 0.0
        %1392 = vmatmul.mubr.f32.gmra.mxu0 %v1226
        %v1393 = vpop.f32.mrf.mxu0
        %v1394 = vadd.f32 %v1250, %v1393
        %v1395 = vpop.f32.mrf.mxu0
        %1396 = vdwg.mxu0
        %vm1397 = vcmask 72704
        %1398 = vst.msk [vmem:[%s241] sm:$0xff] %vm1397, %v1319
        %1399 = vst.msk [vmem:[%s241 + $0x8] sm:$0xff] %vm1397, %v1324
        %1400 = vst.msk [vmem:[%s241 + $0x10] sm:$0xff] %vm1397, %v1329
        %1401 = vst.msk [vmem:[%s241 + $0x18] sm:$0xff] %vm1397, %v1334
        %1402 = vst.msk [vmem:[%s241 + $0x20] sm:$0xff] %vm1397, %v1339
        %1403 = vst.msk [vmem:[%s241 + $0x28] sm:$0xff] %vm1397, %v1344
        %1404 = vst.msk [vmem:[%s241 + $0x30] sm:$0xff] %vm1397, %v1349
        %1405 = vst.msk [vmem:[%s241 + $0x38] sm:$0xff] %vm1397, %v1354
        %1406 = vst.msk [vmem:[%s241 + $0x40] sm:$0xff] %vm1397, %v1359
        %1407 = vst.msk [vmem:[%s241 + $0x48] sm:$0xff] %vm1397, %v1364
        %1408 = vst.msk [vmem:[%s241 + $0x50] sm:$0xff] %vm1397, %v1369
        %1409 = vst.msk [vmem:[%s241 + $0x58] sm:$0xff] %vm1397, %v1374
        %1410 = vst.msk [vmem:[%s241 + $0x60] sm:$0xff] %vm1397, %v1379
        %1411 = vst.msk [vmem:[%s241 + $0x68] sm:$0xff] %vm1397, %v1384
        %1412 = vst.msk [vmem:[%s241 + $0x70] sm:$0xff] %vm1397, %v1389
        %1413 = vst.msk [vmem:[%s241 + $0x78] sm:$0xff] %vm1397, %v1394
        %s1414 = smul.u32 16, %s17
        %p1415 = scmp.lt.s32.totalorder %s1414, 31
        %s1416 = scalar_select %p1415, %s1414, 31
        %s1417 = smul.addr %s1416, 8
        %s1418 = scalar_lea.vmem %s5, %s1417
        // Predicated region
        $region45: #{tpu_custom_call.1} parent=39 // pred_check
          %p1419 = pneg %p145
        $region46: #{tpu_custom_call.1} parent=39 // pred_check_branch
          %1421 = sbr.rel (%p1419) target = $region48
        $region47: #{tpu_custom_call.1} parent=39 // pred_region
          %s1422 = smul.u32 16, %s17
        $region48: #{tpu_custom_call.1} parent=39 // pred_fallthru
          _
      $region40: #{tpu_custom_call.1} parent=5 // pred_fallthru
        _
      %p1423 = scmp.le.s32.totalorder 2, %s12
      // Predicated region
      $region49: #{tpu_custom_call.1} parent=5 // pred_check
        %p1424 = pneg %p1423
      $region50: #{tpu_custom_call.1} parent=5 // pred_check_branch
        %1426 = sbr.rel (%p1424) target = $region52
      $region51: #{tpu_custom_call.1} parent=5 // pred_region
        %s1427 = ssub.s32 %s12, 2
        // Predicated region
        $region53: #{tpu_custom_call.1} parent=51 // pred_check
          %p1428 = pneg %p151
        $region54: #{tpu_custom_call.1} parent=51 // pred_check_branch
          %1430 = sbr.rel (%p1428) target = $region56
        $region55: #{tpu_custom_call.1} parent=51 // pred_region
          %s1431 = smul.u32 16, %s18
          %p1432 = scmp.lt.s32.totalorder %s1431, 31
          %s1433 = scalar_select %p1432, %s1431, 31
          %s1434 = smul.addr %s1433, 8
          %s1435 = scalar_lea.vmem %s5, %s1434
        $region56: #{tpu_custom_call.1} parent=51 // pred_fallthru
          _
      $region52: #{tpu_custom_call.1} parent=5 // pred_fallthru
        _
    $region6: #{tpu_custom_call.1} parent=1 // loop_footer
      %s16 = sadd.s32 1, %s12
    $region7: #{tpu_custom_call.1} parent=1 // loop_footer_branch
      %11 = sbr.rel target = $region3
    $region8: #{tpu_custom_call.1} parent=1 // loop_exit
      _
    %1436 = vsyncpa [#allocation3], 1
    %s1437 = scalar_lea.sflag [#allocation3], 1
    %1438 = vsyncpa %s1437, 1

</llo_original>
